<compile_context>
chip_gen: v7x
topology: tpu7x:2x2x1
jax: 0.10.0
libtpu: 0.0.40
codegen_flags: <defaults>
</compile_context>

<pallas_src>
import jax
import jax.numpy as jnp
from jax.experimental import pallas as pl
from jax.experimental.pallas import tpu as pltpu


def space_kernel(x_ref,
                 w1e_ref, b1e_ref, w2e_ref, b2e_ref,
                 w1d_ref, b1d_ref, w2d_ref, b2d_ref,
                 o_ref):
    """Fused encoder->decoder MLP. bf16 MXU matmuls, f32 accumulation."""
    bf16 = jnp.bfloat16
    x = x_ref[...]                                                    # (tb, F) bf16

    # --- encoder ---
    h = jnp.dot(x, w1e_ref[...], preferred_element_type=jnp.float32) + b1e_ref[...]
    h = jnp.maximum(h, 0.0).astype(bf16)                              # ReLU, back to bf16
    z = jnp.dot(h, w2e_ref[...], preferred_element_type=jnp.float32) + b2e_ref[...]

    # --- decoder ---
    z = z.astype(bf16)
    h2 = jnp.dot(z, w1d_ref[...], preferred_element_type=jnp.float32) + b1d_ref[...]
    h2 = jnp.maximum(h2, 0.0).astype(bf16)                            # ReLU
    y = jnp.dot(h2, w2d_ref[...], preferred_element_type=jnp.float32) + b2d_ref[...]

    o_ref[...] = y.astype(o_ref.dtype)


def _pick_tile_b(B):
    """Largest batch tile in {512,...,8} that leaves >=2 grid steps.

    >=2 parallel steps lets v7x's two TensorCores both run; a big tile fills
    the MXU rows and amortizes per-grid-step overhead. Tiny batches fall back
    to a single padded 8-row tile.
    """
    for cand in (512, 256, 128, 64, 32, 16, 8):
        if B >= 2 * cand:
            return cand
    return 8


def space_forward(x, params, *, tile_b=None):
    """x: (B, F) float32. params: dict of pre-transposed (in, out) weights."""
    orig_dtype = x.dtype
    B, F = x.shape
    H = params["w1e"].shape[1]

    if tile_b is None:
        tile_b = _pick_tile_b(B)

    # Pad batch to a multiple of the tile (sliced off at the end).
    B_pad = pl.cdiv(B, tile_b) * tile_b
    if B_pad != B:
        x = jnp.pad(x, ((0, B_pad - B), (0, 0)))

    # bf16 operands for the MXU; biases stay f32 (added after f32 accumulation).
    xb = x.astype(jnp.bfloat16)
    wb = {k: params[k].astype(jnp.bfloat16) for k in ("w1e", "w2e", "w1d", "w2d")}

    grid = (B_pad // tile_b,)

    # VMEM budget: single-buffered bf16 weights + double-buffered x/out tiles
    # + f32 intermediates, ~2x headroom, capped below v7x's 64 MiB physical.
    weight_bytes = 4 * F * H * 2 + 2 * (H + F) * 4
    io_bytes = 2 * tile_b * F * (2 + 4)
    interm_bytes = 4 * tile_b * max(H, F) * 4
    vmem_limit = int(min(max(2 * (weight_bytes + io_bytes + interm_bytes), 8 << 20),
                         48 << 20))
    # TODO(synk): if 4*F*H bf16 weights no longer fit the VMEM budget (large F /
    # multiplier, esp. v7x 64 MiB), stream the hidden dim H as an "arbitrary"
    # reduction grid axis (chunked w1/w2 + f32 accumulator) instead of keeping
    # all four weight matrices resident.

    cost = pl.CostEstimate(
        flops=8 * B_pad * F * H,                         # 4 matmuls, 2*M*K*N each
        transcendentals=0,
        bytes_accessed=B_pad * F * (2 + 4) + 4 * F * H * 2 + 2 * (H + F) * 4,
    )

    def build_and_call(single_buffer_weights):
        def rep(shape):
            # Grid-invariant weights/biases: index_map always (0,0); single
            # buffering halves their VMEM footprint.
            if single_buffer_weights:
                return pl.BlockSpec(shape, lambda i: (0, 0),
                                    pipeline_mode=pl.Buffered(1))
            return pl.BlockSpec(shape, lambda i: (0, 0))

        grid_spec = pltpu.PrefetchScalarGridSpec(
            num_scalar_prefetch=0,
            grid=grid,
            in_specs=[
                pl.BlockSpec((tile_b, F), lambda i: (i, 0)),   # x tile over batch
                rep((F, H)), rep((1, H)),                      # encoder layer1
                rep((H, F)), rep((1, F)),                      # encoder layer2
                rep((F, H)), rep((1, H)),                      # decoder layer1
                rep((H, F)), rep((1, F)),                      # decoder layer2
            ],
            out_specs=pl.BlockSpec((tile_b, F), lambda i: (i, 0)),
        )

        return pl.pallas_call(
            space_kernel,
            out_shape=jax.ShapeDtypeStruct((B_pad, F), orig_dtype),
            grid_spec=grid_spec,
            compiler_params=pltpu.CompilerParams(
                dimension_semantics=("parallel",),
                vmem_limit_bytes=vmem_limit),
            cost_estimate=cost,
        )(xb,
          wb["w1e"], params["b1e"], wb["w2e"], params["b2e"],
          wb["w1d"], params["b1d"], wb["w2d"], params["b2d"])

    try:
        out = build_and_call(single_buffer_weights=True)
    except Exception:
        # Fallback if this JAX build rejects pipeline_mode on the grid pipeline.
        out = build_and_call(single_buffer_weights=False)

    return out[:B] if B_pad != B else out


def init_params(key, feature_size, feature_multiplier):
    """Deterministic init. Weights stored pre-transposed as (in, out), f32."""
    F = feature_size
    H = feature_size * feature_multiplier
    ks = jax.random.split(key, 8)
    scale_in = 1.0 / jnp.sqrt(F)
    scale_hid = 1.0 / jnp.sqrt(H)
    return {
        # encoder
        "w1e": jax.random.uniform(ks[0], (F, H), jnp.float32, -scale_in, scale_in),
        "b1e": jax.random.uniform(ks[1], (1, H), jnp.float32, -scale_in, scale_in),
        "w2e": jax.random.uniform(ks[2], (H, F), jnp.float32, -scale_hid, scale_hid),
        "b2e": jax.random.uniform(ks[3], (1, F), jnp.float32, -scale_hid, scale_hid),
        # decoder
        "w1d": jax.random.uniform(ks[4], (F, H), jnp.float32, -scale_in, scale_in),
        "b1d": jax.random.uniform(ks[5], (1, H), jnp.float32, -scale_in, scale_in),
        "w2d": jax.random.uniform(ks[6], (H, F), jnp.float32, -scale_hid, scale_hid),
        "b2d": jax.random.uniform(ks[7], (1, F), jnp.float32, -scale_hid, scale_hid),
    }


def reference_forward(x, p):
    """Pure-JAX reference mirroring the kernel's bf16-in / f32-accumulate math."""
    bf = jnp.bfloat16

    def lin(a, w, b):
        return jnp.dot(a.astype(bf), w.astype(bf),
                       preferred_element_type=jnp.float32) + b

    h = jnp.maximum(lin(x, p["w1e"], p["b1e"]), 0.0)
    z = lin(h, p["w2e"], p["b2e"])
    h2 = jnp.maximum(lin(z, p["w1d"], p["b1d"]), 0.0)
    return lin(h2, p["w2d"], p["b2d"])


if __name__ == "__main__":
    # Small shapes consistent with the module: batch=64, feature_size=128, mult=2
    B, F, MULT = 64, 128, 2
    key = jax.random.PRNGKey(0)
    kx, kp = jax.random.split(key)

    x = jax.random.normal(kx, (B, F), jnp.float32)
    params = init_params(kp, F, MULT)

    out = jax.block_until_ready(space_forward(x, params))
    ref = reference_forward(x, params)

    assert out.shape == (B, F)
    max_err = float(jnp.max(jnp.abs(out - ref)))
    assert jnp.allclose(out, ref, atol=2e-2, rtol=2e-2), \
        f"mismatch vs reference (max abs err {max_err})"

    print("KERNEL_OK")
</pallas_src>

<mosaic_0001>
module attributes {stable_mosaic.version = 11 : i64} {
  func.func @space_kernel(%arg0: i32, %arg1: memref<32x128xbf16, #tpu.memory_space<vmem>>, %arg2: memref<128x256xbf16, #tpu.memory_space<vmem>>, %arg3: memref<1x256xf32, #tpu.memory_space<vmem>>, %arg4: memref<256x128xbf16, #tpu.memory_space<vmem>>, %arg5: memref<1x128xf32, #tpu.memory_space<vmem>>, %arg6: memref<128x256xbf16, #tpu.memory_space<vmem>>, %arg7: memref<1x256xf32, #tpu.memory_space<vmem>>, %arg8: memref<256x128xbf16, #tpu.memory_space<vmem>>, %arg9: memref<1x128xf32, #tpu.memory_space<vmem>>, %arg10: memref<32x128xf32, #tpu.memory_space<vmem>>) attributes {dimension_semantics = [#tpu.dimension_semantics<parallel>], iteration_bounds = array<i64: 2>, scalar_prefetch = 0 : i64, scratch_operands = 0 : i64, tpu.core_type = #tpu.core_type<tc>, window_params = [{transform_indices = @transform_0, window_bounds = array<i64: 32, 128>}, {pipeline_mode = #tpu.pipeline_mode<synchronous>, transform_indices = @transform_1, window_bounds = array<i64: 128, 256>}, {pipeline_mode = #tpu.pipeline_mode<synchronous>, transform_indices = @transform_2, window_bounds = array<i64: 1, 256>}, {pipeline_mode = #tpu.pipeline_mode<synchronous>, transform_indices = @transform_3, window_bounds = array<i64: 256, 128>}, {pipeline_mode = #tpu.pipeline_mode<synchronous>, transform_indices = @transform_4, window_bounds = array<i64: 1, 128>}, {pipeline_mode = #tpu.pipeline_mode<synchronous>, transform_indices = @transform_5, window_bounds = array<i64: 128, 256>}, {pipeline_mode = #tpu.pipeline_mode<synchronous>, transform_indices = @transform_6, window_bounds = array<i64: 1, 256>}, {pipeline_mode = #tpu.pipeline_mode<synchronous>, transform_indices = @transform_7, window_bounds = array<i64: 256, 128>}, {pipeline_mode = #tpu.pipeline_mode<synchronous>, transform_indices = @transform_8, window_bounds = array<i64: 1, 128>}, {transform_indices = @transform_9, window_bounds = array<i64: 32, 128>}]} {
    %c0 = arith.constant 0 : index
    %c0_0 = arith.constant 0 : index
    %0 = vector.load %arg1[%c0, %c0_0] : memref<32x128xbf16, #tpu.memory_space<vmem>>, vector<32x128xbf16>
    %c0_1 = arith.constant 0 : index
    %c0_2 = arith.constant 0 : index
    %1 = vector.load %arg2[%c0_1, %c0_2] : memref<128x256xbf16, #tpu.memory_space<vmem>>, vector<128x256xbf16>
    %cst = arith.constant dense<0.000000e+00> : vector<32x256xf32>
    %2 = tpu.matmul %0, %1, %cst {dimension_numbers = #tpu.dot_dimension_numbers<[1], [0], [0], [1], [0, 0, 1, 1], [], []>} : vector<32x128xbf16>, vector<128x256xbf16>, vector<32x256xf32> -> vector<32x256xf32>
    %c0_3 = arith.constant 0 : index
    %c0_4 = arith.constant 0 : index
    %3 = vector.load %arg3[%c0_3, %c0_4] : memref<1x256xf32, #tpu.memory_space<vmem>>, vector<1x256xf32>
    %4 = vector.broadcast %3 : vector<1x256xf32> to vector<32x256xf32>
    %5 = arith.addf %2, %4 : vector<32x256xf32>
    %cst_5 = arith.constant 0.000000e+00 : f32
    %6 = vector.broadcast %cst_5 : f32 to vector<32x256xf32>
    %7 = arith.maximumf %5, %6 : vector<32x256xf32>
    %8 = arith.truncf %7 : vector<32x256xf32> to vector<32x256xbf16>
    %c0_6 = arith.constant 0 : index
    %c0_7 = arith.constant 0 : index
    %9 = vector.load %arg4[%c0_6, %c0_7] : memref<256x128xbf16, #tpu.memory_space<vmem>>, vector<256x128xbf16>
    %cst_8 = arith.constant dense<0.000000e+00> : vector<32x128xf32>
    %10 = tpu.matmul %8, %9, %cst_8 {dimension_numbers = #tpu.dot_dimension_numbers<[1], [0], [0], [1], [0, 0, 1, 1], [], []>} : vector<32x256xbf16>, vector<256x128xbf16>, vector<32x128xf32> -> vector<32x128xf32>
    %c0_9 = arith.constant 0 : index
    %c0_10 = arith.constant 0 : index
    %11 = vector.load %arg5[%c0_9, %c0_10] : memref<1x128xf32, #tpu.memory_space<vmem>>, vector<1x128xf32>
    %12 = vector.broadcast %11 : vector<1x128xf32> to vector<32x128xf32>
    %13 = arith.addf %10, %12 : vector<32x128xf32>
    %14 = arith.truncf %13 : vector<32x128xf32> to vector<32x128xbf16>
    %c0_11 = arith.constant 0 : index
    %c0_12 = arith.constant 0 : index
    %15 = vector.load %arg6[%c0_11, %c0_12] : memref<128x256xbf16, #tpu.memory_space<vmem>>, vector<128x256xbf16>
    %cst_13 = arith.constant dense<0.000000e+00> : vector<32x256xf32>
    %16 = tpu.matmul %14, %15, %cst_13 {dimension_numbers = #tpu.dot_dimension_numbers<[1], [0], [0], [1], [0, 0, 1, 1], [], []>} : vector<32x128xbf16>, vector<128x256xbf16>, vector<32x256xf32> -> vector<32x256xf32>
    %c0_14 = arith.constant 0 : index
    %c0_15 = arith.constant 0 : index
    %17 = vector.load %arg7[%c0_14, %c0_15] : memref<1x256xf32, #tpu.memory_space<vmem>>, vector<1x256xf32>
    %18 = vector.broadcast %17 : vector<1x256xf32> to vector<32x256xf32>
    %19 = arith.addf %16, %18 : vector<32x256xf32>
    %cst_16 = arith.constant 0.000000e+00 : f32
    %20 = vector.broadcast %cst_16 : f32 to vector<32x256xf32>
    %21 = arith.maximumf %19, %20 : vector<32x256xf32>
    %22 = arith.truncf %21 : vector<32x256xf32> to vector<32x256xbf16>
    %c0_17 = arith.constant 0 : index
    %c0_18 = arith.constant 0 : index
    %23 = vector.load %arg8[%c0_17, %c0_18] : memref<256x128xbf16, #tpu.memory_space<vmem>>, vector<256x128xbf16>
    %cst_19 = arith.constant dense<0.000000e+00> : vector<32x128xf32>
    %24 = tpu.matmul %22, %23, %cst_19 {dimension_numbers = #tpu.dot_dimension_numbers<[1], [0], [0], [1], [0, 0, 1, 1], [], []>} : vector<32x256xbf16>, vector<256x128xbf16>, vector<32x128xf32> -> vector<32x128xf32>
    %c0_20 = arith.constant 0 : index
    %c0_21 = arith.constant 0 : index
    %25 = vector.load %arg9[%c0_20, %c0_21] : memref<1x128xf32, #tpu.memory_space<vmem>>, vector<1x128xf32>
    %26 = vector.broadcast %25 : vector<1x128xf32> to vector<32x128xf32>
    %27 = arith.addf %24, %26 : vector<32x128xf32>
    %c0_22 = arith.constant 0 : index
    %c0_23 = arith.constant 0 : index
    %28 = vector.load %arg10[%c0_22, %c0_23] : memref<32x128xf32, #tpu.memory_space<vmem>>, vector<32x128xf32>
    tpu.vector_store %arg10[%c0_22, %c0_23], %27 {strides = array<i32>} : memref<32x128xf32, #tpu.memory_space<vmem>>, vector<32x128xf32>,
    return
  }
  func.func @transform_0(%arg0: i32) -> (i32, i32) {
    %c0_i32 = arith.constant 0 : i32
    %c0_i32_0 = arith.constant 0 : i32
    return %arg0, %c0_i32 : i32, i32
  }
  func.func @transform_1(%arg0: i32) -> (i32, i32) {
    %c0_i32 = arith.constant 0 : i32
    %c0_i32_0 = arith.constant 0 : i32
    %c0_i32_1 = arith.constant 0 : i32
    return %c0_i32, %c0_i32_0 : i32, i32
  }
  func.func @transform_2(%arg0: i32) -> (i32, i32) {
    %c0_i32 = arith.constant 0 : i32
    %c0_i32_0 = arith.constant 0 : i32
    %c0_i32_1 = arith.constant 0 : i32
    return %c0_i32, %c0_i32_0 : i32, i32
  }
  func.func @transform_3(%arg0: i32) -> (i32, i32) {
    %c0_i32 = arith.constant 0 : i32
    %c0_i32_0 = arith.constant 0 : i32
    %c0_i32_1 = arith.constant 0 : i32
    return %c0_i32, %c0_i32_0 : i32, i32
  }
  func.func @transform_4(%arg0: i32) -> (i32, i32) {
    %c0_i32 = arith.constant 0 : i32
    %c0_i32_0 = arith.constant 0 : i32
    %c0_i32_1 = arith.constant 0 : i32
    return %c0_i32, %c0_i32_0 : i32, i32
  }
  func.func @transform_5(%arg0: i32) -> (i32, i32) {
    %c0_i32 = arith.constant 0 : i32
    %c0_i32_0 = arith.constant 0 : i32
    %c0_i32_1 = arith.constant 0 : i32
    return %c0_i32, %c0_i32_0 : i32, i32
  }
  func.func @transform_6(%arg0: i32) -> (i32, i32) {
    %c0_i32 = arith.constant 0 : i32
    %c0_i32_0 = arith.constant 0 : i32
    %c0_i32_1 = arith.constant 0 : i32
    return %c0_i32, %c0_i32_0 : i32, i32
  }
  func.func @transform_7(%arg0: i32) -> (i32, i32) {
    %c0_i32 = arith.constant 0 : i32
    %c0_i32_0 = arith.constant 0 : i32
    %c0_i32_1 = arith.constant 0 : i32
    return %c0_i32, %c0_i32_0 : i32, i32
  }
  func.func @transform_8(%arg0: i32) -> (i32, i32) {
    %c0_i32 = arith.constant 0 : i32
    %c0_i32_0 = arith.constant 0 : i32
    %c0_i32_1 = arith.constant 0 : i32
    return %c0_i32, %c0_i32_0 : i32, i32
  }
  func.func @transform_9(%arg0: i32) -> (i32, i32) {
    %c0_i32 = arith.constant 0 : i32
    %c0_i32_0 = arith.constant 0 : i32
    return %arg0, %c0_i32 : i32, i32
  }
}

module attributes {stable_mosaic.version = 11 : i64} {
  func.func @space_kernel(%arg0: i32, %arg1: memref<32x128xbf16, #tpu.memory_space<vmem>>, %arg2: memref<128x256xbf16, #tpu.memory_space<vmem>>, %arg3: memref<1x256xf32, #tpu.memory_space<vmem>>, %arg4: memref<256x128xbf16, #tpu.memory_space<vmem>>, %arg5: memref<1x128xf32, #tpu.memory_space<vmem>>, %arg6: memref<128x256xbf16, #tpu.memory_space<vmem>>, %arg7: memref<1x256xf32, #tpu.memory_space<vmem>>, %arg8: memref<256x128xbf16, #tpu.memory_space<vmem>>, %arg9: memref<1x128xf32, #tpu.memory_space<vmem>>, %arg10: memref<32x128xf32, #tpu.memory_space<vmem>>) attributes {dimension_semantics = [#tpu.dimension_semantics<parallel>], iteration_bounds = array<i64: 2>, scalar_prefetch = 0 : i64, scratch_operands = 0 : i64, tpu.core_type = #tpu.core_type<tc>, window_params = [{transform_indices = @transform_0, window_bounds = array<i64: 32, 128>}, {pipeline_mode = #tpu.pipeline_mode<synchronous>, transform_indices = @transform_1, window_bounds = array<i64: 128, 256>}, {pipeline_mode = #tpu.pipeline_mode<synchronous>, transform_indices = @transform_2, window_bounds = array<i64: 1, 256>}, {pipeline_mode = #tpu.pipeline_mode<synchronous>, transform_indices = @transform_3, window_bounds = array<i64: 256, 128>}, {pipeline_mode = #tpu.pipeline_mode<synchronous>, transform_indices = @transform_4, window_bounds = array<i64: 1, 128>}, {pipeline_mode = #tpu.pipeline_mode<synchronous>, transform_indices = @transform_5, window_bounds = array<i64: 128, 256>}, {pipeline_mode = #tpu.pipeline_mode<synchronous>, transform_indices = @transform_6, window_bounds = array<i64: 1, 256>}, {pipeline_mode = #tpu.pipeline_mode<synchronous>, transform_indices = @transform_7, window_bounds = array<i64: 256, 128>}, {pipeline_mode = #tpu.pipeline_mode<synchronous>, transform_indices = @transform_8, window_bounds = array<i64: 1, 128>}, {transform_indices = @transform_9, window_bounds = array<i64: 32, 128>}]} {
    %c0 = arith.constant 0 : index
    %c0_0 = arith.constant 0 : index
    %0 = vector.load %arg1[%c0, %c0_0] : memref<32x128xbf16, #tpu.memory_space<vmem>>, vector<32x128xbf16>
    %c0_1 = arith.constant 0 : index
    %c0_2 = arith.constant 0 : index
    %1 = vector.load %arg2[%c0_1, %c0_2] : memref<128x256xbf16, #tpu.memory_space<vmem>>, vector<128x256xbf16>
    %cst = arith.constant dense<0.000000e+00> : vector<32x256xf32>
    %2 = tpu.matmul %0, %1, %cst {dimension_numbers = #tpu.dot_dimension_numbers<[1], [0], [0], [1], [0, 0, 1, 1], [], []>} : vector<32x128xbf16>, vector<128x256xbf16>, vector<32x256xf32> -> vector<32x256xf32>
    %c0_3 = arith.constant 0 : index
    %c0_4 = arith.constant 0 : index
    %3 = vector.load %arg3[%c0_3, %c0_4] : memref<1x256xf32, #tpu.memory_space<vmem>>, vector<1x256xf32>
    %4 = vector.broadcast %3 : vector<1x256xf32> to vector<32x256xf32>
    %5 = arith.addf %2, %4 : vector<32x256xf32>
    %cst_5 = arith.constant 0.000000e+00 : f32
    %6 = vector.broadcast %cst_5 : f32 to vector<32x256xf32>
    %7 = arith.maximumf %5, %6 : vector<32x256xf32>
    %8 = arith.truncf %7 : vector<32x256xf32> to vector<32x256xbf16>
    %c0_6 = arith.constant 0 : index
    %c0_7 = arith.constant 0 : index
    %9 = vector.load %arg4[%c0_6, %c0_7] : memref<256x128xbf16, #tpu.memory_space<vmem>>, vector<256x128xbf16>
    %cst_8 = arith.constant dense<0.000000e+00> : vector<32x128xf32>
    %10 = tpu.matmul %8, %9, %cst_8 {dimension_numbers = #tpu.dot_dimension_numbers<[1], [0], [0], [1], [0, 0, 1, 1], [], []>} : vector<32x256xbf16>, vector<256x128xbf16>, vector<32x128xf32> -> vector<32x128xf32>
    %c0_9 = arith.constant 0 : index
    %c0_10 = arith.constant 0 : index
    %11 = vector.load %arg5[%c0_9, %c0_10] : memref<1x128xf32, #tpu.memory_space<vmem>>, vector<1x128xf32>
    %12 = vector.broadcast %11 : vector<1x128xf32> to vector<32x128xf32>
    %13 = arith.addf %10, %12 : vector<32x128xf32>
    %14 = arith.truncf %13 : vector<32x128xf32> to vector<32x128xbf16>
    %c0_11 = arith.constant 0 : index
    %c0_12 = arith.constant 0 : index
    %15 = vector.load %arg6[%c0_11, %c0_12] : memref<128x256xbf16, #tpu.memory_space<vmem>>, vector<128x256xbf16>
    %cst_13 = arith.constant dense<0.000000e+00> : vector<32x256xf32>
    %16 = tpu.matmul %14, %15, %cst_13 {dimension_numbers = #tpu.dot_dimension_numbers<[1], [0], [0], [1], [0, 0, 1, 1], [], []>} : vector<32x128xbf16>, vector<128x256xbf16>, vector<32x256xf32> -> vector<32x256xf32>
    %c0_14 = arith.constant 0 : index
    %c0_15 = arith.constant 0 : index
    %17 = vector.load %arg7[%c0_14, %c0_15] : memref<1x256xf32, #tpu.memory_space<vmem>>, vector<1x256xf32>
    %18 = vector.broadcast %17 : vector<1x256xf32> to vector<32x256xf32>
    %19 = arith.addf %16, %18 : vector<32x256xf32>
    %cst_16 = arith.constant 0.000000e+00 : f32
    %20 = vector.broadcast %cst_16 : f32 to vector<32x256xf32>
    %21 = arith.maximumf %19, %20 : vector<32x256xf32>
    %22 = arith.truncf %21 : vector<32x256xf32> to vector<32x256xbf16>
    %c0_17 = arith.constant 0 : index
    %c0_18 = arith.constant 0 : index
    %23 = vector.load %arg8[%c0_17, %c0_18] : memref<256x128xbf16, #tpu.memory_space<vmem>>, vector<256x128xbf16>
    %cst_19 = arith.constant dense<0.000000e+00> : vector<32x128xf32>
    %24 = tpu.matmul %22, %23, %cst_19 {dimension_numbers = #tpu.dot_dimension_numbers<[1], [0], [0], [1], [0, 0, 1, 1], [], []>} : vector<32x256xbf16>, vector<256x128xbf16>, vector<32x128xf32> -> vector<32x128xf32>
    %c0_20 = arith.constant 0 : index
    %c0_21 = arith.constant 0 : index
    %25 = vector.load %arg9[%c0_20, %c0_21] : memref<1x128xf32, #tpu.memory_space<vmem>>, vector<1x128xf32>
    %26 = vector.broadcast %25 : vector<1x128xf32> to vector<32x128xf32>
    %27 = arith.addf %24, %26 : vector<32x128xf32>
    %c0_22 = arith.constant 0 : index
    %c0_23 = arith.constant 0 : index
    %28 = vector.load %arg10[%c0_22, %c0_23] : memref<32x128xf32, #tpu.memory_space<vmem>>, vector<32x128xf32>
    tpu.vector_store %arg10[%c0_22, %c0_23], %27 {strides = array<i32>} : memref<32x128xf32, #tpu.memory_space<vmem>>, vector<32x128xf32>,
    return
  }
  func.func @transform_0(%arg0: i32) -> (i32, i32) {
    %c0_i32 = arith.constant 0 : i32
    %c0_i32_0 = arith.constant 0 : i32
    return %arg0, %c0_i32 : i32, i32
  }
  func.func @transform_1(%arg0: i32) -> (i32, i32) {
    %c0_i32 = arith.constant 0 : i32
    %c0_i32_0 = arith.constant 0 : i32
    %c0_i32_1 = arith.constant 0 : i32
    return %c0_i32, %c0_i32_0 : i32, i32
  }
  func.func @transform_2(%arg0: i32) -> (i32, i32) {
    %c0_i32 = arith.constant 0 : i32
    %c0_i32_0 = arith.constant 0 : i32
    %c0_i32_1 = arith.constant 0 : i32
    return %c0_i32, %c0_i32_0 : i32, i32
  }
  func.func @transform_3(%arg0: i32) -> (i32, i32) {
    %c0_i32 = arith.constant 0 : i32
    %c0_i32_0 = arith.constant 0 : i32
    %c0_i32_1 = arith.constant 0 : i32
    return %c0_i32, %c0_i32_0 : i32, i32
  }
  func.func @transform_4(%arg0: i32) -> (i32, i32) {
    %c0_i32 = arith.constant 0 : i32
    %c0_i32_0 = arith.constant 0 : i32
    %c0_i32_1 = arith.constant 0 : i32
    return %c0_i32, %c0_i32_0 : i32, i32
  }
  func.func @transform_5(%arg0: i32) -> (i32, i32) {
    %c0_i32 = arith.constant 0 : i32
    %c0_i32_0 = arith.constant 0 : i32
    %c0_i32_1 = arith.constant 0 : i32
    return %c0_i32, %c0_i32_0 : i32, i32
  }
  func.func @transform_6(%arg0: i32) -> (i32, i32) {
    %c0_i32 = arith.constant 0 : i32
    %c0_i32_0 = arith.constant 0 : i32
    %c0_i32_1 = arith.constant 0 : i32
    return %c0_i32, %c0_i32_0 : i32, i32
  }
  func.func @transform_7(%arg0: i32) -> (i32, i32) {
    %c0_i32 = arith.constant 0 : i32
    %c0_i32_0 = arith.constant 0 : i32
    %c0_i32_1 = arith.constant 0 : i32
    return %c0_i32, %c0_i32_0 : i32, i32
  }
  func.func @transform_8(%arg0: i32) -> (i32, i32) {
    %c0_i32 = arith.constant 0 : i32
    %c0_i32_0 = arith.constant 0 : i32
    %c0_i32_1 = arith.constant 0 : i32
    return %c0_i32, %c0_i32_0 : i32, i32
  }
  func.func @transform_9(%arg0: i32) -> (i32, i32) {
    %c0_i32 = arith.constant 0 : i32
    %c0_i32_0 = arith.constant 0 : i32
    return %arg0, %c0_i32 : i32, i32
  }
}

</mosaic_0001>

<llo_original>
// kernel: tpu_custom_call.1
$region0: #{tpu_custom_call.1}
  #allocation0 [shape = 'u32[]', space=smem, size = 0x4, offset = 0x4, fixed_abs, tag = 'smem constant byte address 0x4 - core index']
  #allocation1 [shape = 'u32[144,128]{1,0:T(1,128)}', space=vmem, size = 0x12000, scoped, tag = 'internal scratch']
  %s0 = inlined_call_operand.hbm [shape: bf16[64,128], index: 0, kind: input, shape index: {}]
  %s1 = inlined_call_operand.hbm [shape: bf16[128,256], index: 1, kind: input, shape index: {}]
  %s2 = inlined_call_operand.vmem [shape: f32[1,256], index: 2, kind: input, shape index: {}]
  %s3 = inlined_call_operand.hbm [shape: bf16[256,128], index: 3, kind: input, shape index: {}]
  %s4 = inlined_call_operand.vmem [shape: f32[1,128], index: 4, kind: input, shape index: {}]
  %s5 = inlined_call_operand.hbm [shape: bf16[128,256], index: 5, kind: input, shape index: {}]
  %s6 = inlined_call_operand.vmem [shape: f32[1,256], index: 6, kind: input, shape index: {}]
  %s7 = inlined_call_operand.hbm [shape: bf16[256,128], index: 7, kind: input, shape index: {}]
  %s8 = inlined_call_operand.vmem [shape: f32[1,128], index: 8, kind: input, shape index: {}]
  %s9 = inlined_call_operand.hbm [shape: f32[64,128], index: 9, kind: output, shape index: {}]
  %s10 = sld [smem:[#allocation0]]
  $region89: #{tpu_custom_call.1} parent=0
    _
  %s12 = ssub.s32 1, %s10
  %s13 = scalar_select 0, %s12, %s10
  $region1: #{tpu_custom_call.1} parent=0
    #allocation2 [shape = 'u8[16384]{0}', space=vmem, size = 0x4000, scoped, tag = 'input window, operand 0']
    #allocation3 [shape = 's32[2]{0}', space=sflag, size = 0x8, scoped, tag = 'scoped memory for tpu_custom_call.1']
    #allocation4 [shape = 's32[2]{0}', space=sflag, size = 0x8, scoped, tag = 'scoped memory for tpu_custom_call.1']
    #allocation5 [shape = 'u8[65536]{0}', space=vmem, size = 0x10000, scoped, tag = 'input window, operand 1, single buffered']
    #allocation6 [shape = 's32[1]{0}', space=sflag, size = 0x4, scoped, tag = 'scoped memory for tpu_custom_call.1']
    #allocation7 [shape = 'u8[65536]{0}', space=vmem, size = 0x10000, scoped, tag = 'input window, operand 3, single buffered']
    #allocation8 [shape = 'u8[65536]{0}', space=vmem, size = 0x10000, scoped, tag = 'input window, operand 5, single buffered']
    #allocation9 [shape = 's32[1]{0}', space=sflag, size = 0x4, scoped, tag = 'scoped memory for tpu_custom_call.1']
    #allocation10 [shape = 'u8[65536]{0}', space=vmem, size = 0x10000, scoped, tag = 'input window, operand 7, single buffered']
    #allocation11 [shape = 'u8[32768]{0}', space=vmem, size = 0x8000, scoped, tag = 'output window, operand 0']
    %14 = vsyncpa [#allocation3], 0
    %s15 = scalar_lea.sflag [#allocation3], 1
    %16 = vsyncpa %s15, 0
    %17 = vsyncpa [#allocation6], 0
    %18 = vsyncpa [#allocation9], 0
    %19 = vsyncpa [#allocation4], 0
    %s20 = scalar_lea.sflag [#allocation4], 1
    %21 = vsyncpa %s20, 0
    loop: start=0, step=1, limit=4
    $region2: #{tpu_custom_call.1} parent=1 // loop_pre_header
      _
    $region3: #{tpu_custom_call.1} parent=1 // loop_header
      %s23 = sphi 0, %s27
      %p24 = scmp.ge.s32.totalorder %s23, 4
      %s33 = sphi 0, %s35
      %s36 = sphi 0, %s33
      %s37 = sphi 0, %s36
      %s53 = sphi 0, %s37
      %s57 = sphi 0, %s57
      %s59 = sphi 0, %s57
      %s60 = sphi 0, %s59
      %s74 = sphi 0, %s60
      %s78 = sphi 0, %s78
      %s80 = sphi 0, %s78
      %s81 = sphi 0, %s80
      %s95 = sphi 0, %s81
      %s99 = sphi 0, %s99
      %s101 = sphi 0, %s99
      %s102 = sphi 0, %s101
      %s116 = sphi 0, %s102
      %s120 = sphi 0, %s120
      %s122 = sphi 0, %s120
      %s123 = sphi 0, %s122
      %s137 = sphi 0, %s123
      %s141 = sphi 0, %s141
      %s143 = sphi 0, %s141
      %s144 = sphi 0, %s143
      %s158 = sphi 0, %s144
      %s162 = sphi 0, %s162
      %s164 = sphi 0, %s162
      %s165 = sphi 0, %s164
      %s179 = sphi 0, %s165
      %s183 = sphi 0, %s183
      %s185 = sphi 0, %s183
      %s186 = sphi 0, %s185
      %s200 = sphi 0, %s186
      %s204 = sphi 0, %s204
      %s206 = sphi 0, %s204
      %s207 = sphi 0, %s206
      %s221 = sphi 0, %s207
      %s227 = sphi 0, %s229
      %s230 = sphi 0, %s227
      %s231 = sphi 0, %s230
      %s247 = sphi 0, %s231
    $region4: #{tpu_custom_call.1} parent=1 // loop_header_branch
      %26 = sbr.rel (%p24) target = $region8
    $region5: #{tpu_custom_call.1} parent=1 // loop_body
      %s28 = ssub.s32 %s23, 1
      %s29 = ssub.s32 %s23, 2
      %s30 = sadd.s32 %s23, 1
      %s31 = ssub.s32 %s23, %s30
      %p32 = scmp.eq.s32.totalorder %s31, 0
      %s34 = sadd.s32 %s33, 1
      %s35 = scalar_select %p32, %s33, %s34
      %p38 = pneg %p32
      %p39 = scmp.eq.s32.totalorder %s23, 1
      %p40 = por %p38, %p39
      %p41 = scmp.ne.s32.totalorder %s33, %s36
      %p42 = scmp.eq.s32.totalorder %s23, 0
      %p43 = por %p41, %p42
      %p44 = scmp.ne.s32.totalorder %s33, %s36
      %p45 = scmp.eq.s32.totalorder %s28, 1
      %p46 = por %p44, %p45
      %p47 = scmp.ne.s32.totalorder %s36, %s37
      %p48 = scmp.eq.s32.totalorder %s28, 0
      %p49 = por %p47, %p48
      %p50 = scmp.ne.s32.totalorder %s36, %s37
      %p51 = scmp.eq.s32.totalorder %s29, 1
      %p52 = por %p50, %p51
      %p54 = scmp.ne.s32.totalorder %s37, %s53
      %p55 = scmp.eq.s32.totalorder %s29, 0
      %p56 = por %p54, %p55
      %s58 = sadd.s32 %s57, 1
      %p61 = scmp.eq.s32.totalorder %s23, 1
      %p62 = scmp.ne.s32.totalorder %s57, %s59
      %p63 = scmp.eq.s32.totalorder %s23, 0
      %p64 = por %p62, %p63
      %p65 = scmp.ne.s32.totalorder %s57, %s59
      %p66 = scmp.eq.s32.totalorder %s28, 1
      %p67 = por %p65, %p66
      %p68 = scmp.ne.s32.totalorder %s59, %s60
      %p69 = scmp.eq.s32.totalorder %s28, 0
      %p70 = por %p68, %p69
      %p71 = scmp.ne.s32.totalorder %s59, %s60
      %p72 = scmp.eq.s32.totalorder %s29, 1
      %p73 = por %p71, %p72
      %p75 = scmp.ne.s32.totalorder %s60, %s74
      %p76 = scmp.eq.s32.totalorder %s29, 0
      %p77 = por %p75, %p76
      %s79 = sadd.s32 %s78, 1
      %p82 = scmp.eq.s32.totalorder %s23, 1
      %p83 = scmp.ne.s32.totalorder %s78, %s80
      %p84 = scmp.eq.s32.totalorder %s23, 0
      %p85 = por %p83, %p84
      %p86 = scmp.ne.s32.totalorder %s78, %s80
      %p87 = scmp.eq.s32.totalorder %s28, 1
      %p88 = por %p86, %p87
      %p89 = scmp.ne.s32.totalorder %s80, %s81
      %p90 = scmp.eq.s32.totalorder %s28, 0
      %p91 = por %p89, %p90
      %p92 = scmp.ne.s32.totalorder %s80, %s81
      %p93 = scmp.eq.s32.totalorder %s29, 1
      %p94 = por %p92, %p93
      %p96 = scmp.ne.s32.totalorder %s81, %s95
      %p97 = scmp.eq.s32.totalorder %s29, 0
      %p98 = por %p96, %p97
      %s100 = sadd.s32 %s99, 1
      %p103 = scmp.eq.s32.totalorder %s23, 1
      %p104 = scmp.ne.s32.totalorder %s99, %s101
      %p105 = scmp.eq.s32.totalorder %s23, 0
      %p106 = por %p104, %p105
      %p107 = scmp.ne.s32.totalorder %s99, %s101
      %p108 = scmp.eq.s32.totalorder %s28, 1
      %p109 = por %p107, %p108
      %p110 = scmp.ne.s32.totalorder %s101, %s102
      %p111 = scmp.eq.s32.totalorder %s28, 0
      %p112 = por %p110, %p111
      %p113 = scmp.ne.s32.totalorder %s101, %s102
      %p114 = scmp.eq.s32.totalorder %s29, 1
      %p115 = por %p113, %p114
      %p117 = scmp.ne.s32.totalorder %s102, %s116
      %p118 = scmp.eq.s32.totalorder %s29, 0
      %p119 = por %p117, %p118
      %s121 = sadd.s32 %s120, 1
      %p124 = scmp.eq.s32.totalorder %s23, 1
      %p125 = scmp.ne.s32.totalorder %s120, %s122
      %p126 = scmp.eq.s32.totalorder %s23, 0
      %p127 = por %p125, %p126
      %p128 = scmp.ne.s32.totalorder %s120, %s122
      %p129 = scmp.eq.s32.totalorder %s28, 1
      %p130 = por %p128, %p129
      %p131 = scmp.ne.s32.totalorder %s122, %s123
      %p132 = scmp.eq.s32.totalorder %s28, 0
      %p133 = por %p131, %p132
      %p134 = scmp.ne.s32.totalorder %s122, %s123
      %p135 = scmp.eq.s32.totalorder %s29, 1
      %p136 = por %p134, %p135
      %p138 = scmp.ne.s32.totalorder %s123, %s137
      %p139 = scmp.eq.s32.totalorder %s29, 0
      %p140 = por %p138, %p139
      %s142 = sadd.s32 %s141, 1
      %p145 = scmp.eq.s32.totalorder %s23, 1
      %p146 = scmp.ne.s32.totalorder %s141, %s143
      %p147 = scmp.eq.s32.totalorder %s23, 0
      %p148 = por %p146, %p147
      %p149 = scmp.ne.s32.totalorder %s141, %s143
      %p150 = scmp.eq.s32.totalorder %s28, 1
      %p151 = por %p149, %p150
      %p152 = scmp.ne.s32.totalorder %s143, %s144
      %p153 = scmp.eq.s32.totalorder %s28, 0
      %p154 = por %p152, %p153
      %p155 = scmp.ne.s32.totalorder %s143, %s144
      %p156 = scmp.eq.s32.totalorder %s29, 1
      %p157 = por %p155, %p156
      %p159 = scmp.ne.s32.totalorder %s144, %s158
      %p160 = scmp.eq.s32.totalorder %s29, 0
      %p161 = por %p159, %p160
      %s163 = sadd.s32 %s162, 1
      %p166 = scmp.eq.s32.totalorder %s23, 1
      %p167 = scmp.ne.s32.totalorder %s162, %s164
      %p168 = scmp.eq.s32.totalorder %s23, 0
      %p169 = por %p167, %p168
      %p170 = scmp.ne.s32.totalorder %s162, %s164
      %p171 = scmp.eq.s32.totalorder %s28, 1
      %p172 = por %p170, %p171
      %p173 = scmp.ne.s32.totalorder %s164, %s165
      %p174 = scmp.eq.s32.totalorder %s28, 0
      %p175 = por %p173, %p174
      %p176 = scmp.ne.s32.totalorder %s164, %s165
      %p177 = scmp.eq.s32.totalorder %s29, 1
      %p178 = por %p176, %p177
      %p180 = scmp.ne.s32.totalorder %s165, %s179
      %p181 = scmp.eq.s32.totalorder %s29, 0
      %p182 = por %p180, %p181
      %s184 = sadd.s32 %s183, 1
      %p187 = scmp.eq.s32.totalorder %s23, 1
      %p188 = scmp.ne.s32.totalorder %s183, %s185
      %p189 = scmp.eq.s32.totalorder %s23, 0
      %p190 = por %p188, %p189
      %p191 = scmp.ne.s32.totalorder %s183, %s185
      %p192 = scmp.eq.s32.totalorder %s28, 1
      %p193 = por %p191, %p192
      %p194 = scmp.ne.s32.totalorder %s185, %s186
      %p195 = scmp.eq.s32.totalorder %s28, 0
      %p196 = por %p194, %p195
      %p197 = scmp.ne.s32.totalorder %s185, %s186
      %p198 = scmp.eq.s32.totalorder %s29, 1
      %p199 = por %p197, %p198
      %p201 = scmp.ne.s32.totalorder %s186, %s200
      %p202 = scmp.eq.s32.totalorder %s29, 0
      %p203 = por %p201, %p202
      %s205 = sadd.s32 %s204, 1
      %p208 = scmp.eq.s32.totalorder %s23, 1
      %p209 = scmp.ne.s32.totalorder %s204, %s206
      %p210 = scmp.eq.s32.totalorder %s23, 0
      %p211 = por %p209, %p210
      %p212 = scmp.ne.s32.totalorder %s204, %s206
      %p213 = scmp.eq.s32.totalorder %s28, 1
      %p214 = por %p212, %p213
      %p215 = scmp.ne.s32.totalorder %s206, %s207
      %p216 = scmp.eq.s32.totalorder %s28, 0
      %p217 = por %p215, %p216
      %p218 = scmp.ne.s32.totalorder %s206, %s207
      %p219 = scmp.eq.s32.totalorder %s29, 1
      %p220 = por %p218, %p219
      %p222 = scmp.ne.s32.totalorder %s207, %s221
      %p223 = scmp.eq.s32.totalorder %s29, 0
      %p224 = por %p222, %p223
      %s225 = ssub.s32 %s23, %s30
      %p226 = scmp.eq.s32.totalorder %s225, 0
      %s228 = sadd.s32 %s227, 1
      %s229 = scalar_select %p226, %s227, %s228
      %p232 = pneg %p226
      %p233 = scmp.eq.s32.totalorder %s23, 1
      %p234 = por %p232, %p233
      %p235 = scmp.ne.s32.totalorder %s227, %s230
      %p236 = scmp.eq.s32.totalorder %s23, 0
      %p237 = por %p235, %p236
      %p238 = scmp.ne.s32.totalorder %s227, %s230
      %p239 = scmp.eq.s32.totalorder %s28, 1
      %p240 = por %p238, %p239
      %p241 = scmp.ne.s32.totalorder %s230, %s231
      %p242 = scmp.eq.s32.totalorder %s28, 0
      %p243 = por %p241, %p242
      %p244 = scmp.ne.s32.totalorder %s230, %s231
      %p245 = scmp.eq.s32.totalorder %s29, 1
      %p246 = por %p244, %p245
      %p248 = scmp.ne.s32.totalorder %s231, %s247
      %p249 = scmp.eq.s32.totalorder %s29, 0
      %p250 = por %p248, %p249
      %p251 = scmp.le.s32.totalorder 1, %s23
      %p252 = scmp.lt.s32.totalorder %s23, 3
      %p253 = pnand %p251, %p252
      %p254 = pneg %p253
      // Predicated region
      $region9: #{tpu_custom_call.1} parent=5 // pred_check
        _
      $region10: #{tpu_custom_call.1} parent=5 // pred_check_branch
        %256 = sbr.rel (%p253) target = $region12
      $region11: #{tpu_custom_call.1} parent=5 // pred_region
        %s257 = ssub.s32 %s23, 1
        // Predicated region
        $region13: #{tpu_custom_call.1} parent=11 // pred_check
          %p258 = pneg %p70
        $region14: #{tpu_custom_call.1} parent=11 // pred_check_branch
          %260 = sbr.rel (%p258) target = $region16
        $region15: #{tpu_custom_call.1} parent=11 // pred_region
          %s262 = ssub.s32 2048, 2048
          %263 = vsyncadd [#allocation6], %s262
          %s264 = sshll.u32 [#allocation5], 4
          %s265 = int_to_ptr.vmem [resolvable:$true] %s264
          %270 = dma.hbm_to_vmem [thread:$0]  %s1, 2048, %s265, [#allocation6], 128, 128, 8
        $region16: #{tpu_custom_call.1} parent=11 // pred_fallthru
          _
        // Predicated region
        $region17: #{tpu_custom_call.1} parent=11 // pred_check
          %p271 = pneg %p91
        $region18: #{tpu_custom_call.1} parent=11 // pred_check_branch
          %273 = sbr.rel (%p271) target = $region20
        $region19: #{tpu_custom_call.1} parent=11 // pred_region
          _
        $region20: #{tpu_custom_call.1} parent=11 // pred_fallthru
          _
        // Predicated region
        $region21: #{tpu_custom_call.1} parent=11 // pred_check
          %p274 = pneg %p112
        $region22: #{tpu_custom_call.1} parent=11 // pred_check_branch
          %276 = sbr.rel (%p274) target = $region24
        $region23: #{tpu_custom_call.1} parent=11 // pred_region
          %s278 = ssub.s32 2048, 2048
          %279 = vsyncadd [#allocation6], %s278
          %s280 = sshll.u32 [#allocation7], 4
          %s281 = int_to_ptr.vmem [resolvable:$true] %s280
          %286 = dma.hbm_to_vmem [thread:$0]  %s3, 2048, %s281, [#allocation6], 64, 64, 4
        $region24: #{tpu_custom_call.1} parent=11 // pred_fallthru
          _
        // Predicated region
        $region25: #{tpu_custom_call.1} parent=11 // pred_check
          %p287 = pneg %p133
        $region26: #{tpu_custom_call.1} parent=11 // pred_check_branch
          %289 = sbr.rel (%p287) target = $region28
        $region27: #{tpu_custom_call.1} parent=11 // pred_region
          _
        $region28: #{tpu_custom_call.1} parent=11 // pred_fallthru
          _
        // Predicated region
        $region29: #{tpu_custom_call.1} parent=11 // pred_check
          %p290 = pneg %p154
        $region30: #{tpu_custom_call.1} parent=11 // pred_check_branch
          %292 = sbr.rel (%p290) target = $region32
        $region31: #{tpu_custom_call.1} parent=11 // pred_region
          %s294 = ssub.s32 2048, 2048
          %295 = vsyncadd [#allocation9], %s294
          %s296 = sshll.u32 [#allocation8], 4
          %s297 = int_to_ptr.vmem [resolvable:$true] %s296
          %302 = dma.hbm_to_vmem [thread:$0]  %s5, 2048, %s297, [#allocation9], 128, 128, 8
        $region32: #{tpu_custom_call.1} parent=11 // pred_fallthru
          _
        // Predicated region
        $region33: #{tpu_custom_call.1} parent=11 // pred_check
          %p303 = pneg %p175
        $region34: #{tpu_custom_call.1} parent=11 // pred_check_branch
          %305 = sbr.rel (%p303) target = $region36
        $region35: #{tpu_custom_call.1} parent=11 // pred_region
          _
        $region36: #{tpu_custom_call.1} parent=11 // pred_fallthru
          _
        // Predicated region
        $region37: #{tpu_custom_call.1} parent=11 // pred_check
          %p306 = pneg %p196
        $region38: #{tpu_custom_call.1} parent=11 // pred_check_branch
          %308 = sbr.rel (%p306) target = $region40
        $region39: #{tpu_custom_call.1} parent=11 // pred_region
          %s310 = ssub.s32 2048, 2048
          %311 = vsyncadd [#allocation9], %s310
          %s312 = sshll.u32 [#allocation10], 4
          %s313 = int_to_ptr.vmem [resolvable:$true] %s312
          %318 = dma.hbm_to_vmem [thread:$0]  %s7, 2048, %s313, [#allocation9], 64, 64, 4
        $region40: #{tpu_custom_call.1} parent=11 // pred_fallthru
          _
        // Predicated region
        $region41: #{tpu_custom_call.1} parent=11 // pred_check
          %p319 = pneg %p217
        $region42: #{tpu_custom_call.1} parent=11 // pred_check_branch
          %321 = sbr.rel (%p319) target = $region44
        $region43: #{tpu_custom_call.1} parent=11 // pred_region
          _
        $region44: #{tpu_custom_call.1} parent=11 // pred_fallthru
          _
      $region12: #{tpu_custom_call.1} parent=5 // pred_fallthru
        _
      %p322 = scmp.lt.s32.totalorder %s23, 2
      // Predicated region
      $region45: #{tpu_custom_call.1} parent=5 // pred_check
        %p323 = pneg %p322
      $region46: #{tpu_custom_call.1} parent=5 // pred_check_branch
        %325 = sbr.rel (%p323) target = $region48
      $region47: #{tpu_custom_call.1} parent=5 // pred_region
        // Predicated region
        $region49: #{tpu_custom_call.1} parent=47 // pred_check
          %p326 = pneg %p43
        $region50: #{tpu_custom_call.1} parent=47 // pred_check_branch
          %328 = sbr.rel (%p326) target = $region52
        $region51: #{tpu_custom_call.1} parent=47 // pred_region
          %s329 = sand.u32 %s33, 1
          %s330 = scalar_lea.sflag [#allocation3], %s329
          %s331 = sand.u32 %s33, 1
          %s332 = smul.addr %s331, 16
          %s333 = scalar_lea.vmem [#allocation2], %s332
          %s334 = smul.u32 4, %s23
          %s336 = ssub.s32 256, 256
          %337 = vsyncadd %s330, %s336
          %s338 = smul.addr %s334, 64
          %s339 = scalar_lea.hbm %s0, %s338
          %s340 = sshll.u32 %s333, 4
          %s341 = int_to_ptr.vmem [resolvable:$true] %s340
          %346 = dma.hbm_to_vmem [thread:$0]  %s339, 256, %s341, %s330, 64, 64, 4
        $region52: #{tpu_custom_call.1} parent=47 // pred_fallthru
          _
      $region48: #{tpu_custom_call.1} parent=5 // pred_fallthru
        _
      %p347 = scmp.le.s32.totalorder 1, %s23
      %p348 = scmp.lt.s32.totalorder %s23, 3
      %p349 = pnand %p347, %p348
      %p350 = pneg %p349
      // Predicated region
      $region53: #{tpu_custom_call.1} parent=5 // pred_check
        _
      $region54: #{tpu_custom_call.1} parent=5 // pred_check_branch
        %352 = sbr.rel (%p349) target = $region56
      $region55: #{tpu_custom_call.1} parent=5 // pred_region
        %s353 = ssub.s32 %s23, 1
        %s354 = sand.u32 %s36, 1
        %s355 = scalar_lea.sflag [#allocation3], %s354
        %s356 = sand.u32 %s36, 1
        %s357 = smul.addr %s356, 16
        %s358 = scalar_lea.vmem [#allocation2], %s357
        // Predicated region
        $region57: #{tpu_custom_call.1} parent=55 // pred_check
          %p359 = pneg %p49
        $region58: #{tpu_custom_call.1} parent=55 // pred_check_branch
          %361 = sbr.rel (%p359) target = $region60
        $region59: #{tpu_custom_call.1} parent=55 // pred_region
          %362 = dma.done %s355, 256
        $region60: #{tpu_custom_call.1} parent=55 // pred_fallthru
          _
        // Predicated region
        $region61: #{tpu_custom_call.1} parent=55 // pred_check
          %p363 = pneg %p70
        $region62: #{tpu_custom_call.1} parent=55 // pred_check_branch
          %365 = sbr.rel (%p363) target = $region64
        $region63: #{tpu_custom_call.1} parent=55 // pred_region
          %366 = dma.done [#allocation6], 2048
        $region64: #{tpu_custom_call.1} parent=55 // pred_fallthru
          _
        // Predicated region
        $region65: #{tpu_custom_call.1} parent=55 // pred_check
          %p367 = pneg %p112
        $region66: #{tpu_custom_call.1} parent=55 // pred_check_branch
          %369 = sbr.rel (%p367) target = $region68
        $region67: #{tpu_custom_call.1} parent=55 // pred_region
          %370 = dma.done [#allocation6], 2048
        $region68: #{tpu_custom_call.1} parent=55 // pred_fallthru
          _
        // Predicated region
        $region69: #{tpu_custom_call.1} parent=55 // pred_check
          %p371 = pneg %p154
        $region70: #{tpu_custom_call.1} parent=55 // pred_check_branch
          %373 = sbr.rel (%p371) target = $region72
        $region71: #{tpu_custom_call.1} parent=55 // pred_region
          %374 = dma.done [#allocation9], 2048
        $region72: #{tpu_custom_call.1} parent=55 // pred_fallthru
          _
        // Predicated region
        $region73: #{tpu_custom_call.1} parent=55 // pred_check
          %p375 = pneg %p196
        $region74: #{tpu_custom_call.1} parent=55 // pred_check_branch
          %377 = sbr.rel (%p375) target = $region76
        $region75: #{tpu_custom_call.1} parent=55 // pred_region
          %378 = dma.done [#allocation9], 2048
        $region76: #{tpu_custom_call.1} parent=55 // pred_fallthru
          _
        %s379 = sand.u32 %s36, 1
        %s380 = scalar_lea.sflag [#allocation3], %s379
        %s381 = sand.u32 %s36, 1
        %s382 = smul.addr %s381, 16
        %s383 = scalar_lea.vmem [#allocation2], %s382
        %p384 = pneg %p49
        %p385 = pneg %p46
        %p386 = pneg %p70
        %p387 = pneg %p67
        %p388 = pneg %p91
        %p389 = pneg %p88
        %p390 = pneg %p112
        %p391 = pneg %p109
        %p392 = pneg %p133
        %p393 = pneg %p130
        %p394 = pneg %p154
        %p395 = pneg %p151
        %p396 = pneg %p175
        %p397 = pneg %p172
        %p398 = pneg %p196
        %p399 = pneg %p193
        %p400 = pneg %p217
        %p401 = pneg %p214
        %p402 = pneg %p243
        %p403 = pneg %p240
        %s404 = sand.u32 %s230, 1
        %s405 = scalar_lea.sflag [#allocation4], %s404
        %s406 = sand.u32 %s230, 1
        %s407 = smul.addr %s406, 32
        %s408 = scalar_lea.vmem [#allocation11], %s407
        %s409 = smul.u32 4, %s28
        %s410 = smul.u32 4, %s28
        %v412 = vld [vmem:[%s358] sm:$0xf]
        %v413 = vld [vmem:[%s358 + $0x4] sm:$0xf]
        %v414 = vld [vmem:[%s358 + $0x8] sm:$0xf]
        %v415 = vld [vmem:[%s358 + $0xc] sm:$0xf]
        %v416 = vld [vmem:[#allocation5] sm:$0xff]
        %v417 = vld [vmem:[#allocation5 + $0x8] sm:$0xff]
        %v418 = vld [vmem:[#allocation5 + $0x10] sm:$0xff]
        %v419 = vld [vmem:[#allocation5 + $0x18] sm:$0xff]
        %v420 = vld [vmem:[#allocation5 + $0x20] sm:$0xff]
        %v421 = vld [vmem:[#allocation5 + $0x28] sm:$0xff]
        %v422 = vld [vmem:[#allocation5 + $0x30] sm:$0xff]
        %v423 = vld [vmem:[#allocation5 + $0x38] sm:$0xff]
        %v424 = vld [vmem:[#allocation5 + $0x40] sm:$0xff]
        %v425 = vld [vmem:[#allocation5 + $0x48] sm:$0xff]
        %v426 = vld [vmem:[#allocation5 + $0x50] sm:$0xff]
        %v427 = vld [vmem:[#allocation5 + $0x58] sm:$0xff]
        %v428 = vld [vmem:[#allocation5 + $0x60] sm:$0xff]
        %v429 = vld [vmem:[#allocation5 + $0x68] sm:$0xff]
        %v430 = vld [vmem:[#allocation5 + $0x70] sm:$0xff]
        %v431 = vld [vmem:[#allocation5 + $0x78] sm:$0xff]
        %v432 = vld [vmem:[%s2] sm:$0x3]
        %v434 = vlaneseq
        %v435 = vshrl.u32 %v434, 7
        %v436 = vsub.s32 0, %v435
        %v437 = vrot.slane %v432, %v436
        %v438 = vlaneseq
        %v439 = vshrl.u32 %v438, 7
        %v440 = vsub.s32 1, %v439
        %v441 = vrot.slane %v432, %v440
        %v448 = vunpack.c.l.b16 %v412
        %v449 = vunpack.c.l.b16 %v413
        %v450 = vunpack.c.l.b16 %v414
        %v451 = vunpack.c.l.b16 %v415
        %v452 = vpack.c.b16 %v449, %v448
        %v453 = vpack.c.b16 %v451, %v450
        %v472 = vunpack.c.l.b16 %v416
        %v473 = vunpack.c.h.b16 %v416
        %v474 = vunpack.c.l.b16 %v417
        %v475 = vunpack.c.h.b16 %v417
        %v476 = vunpack.c.l.b16 %v418
        %v477 = vunpack.c.h.b16 %v418
        %v478 = vunpack.c.l.b16 %v419
        %v479 = vunpack.c.h.b16 %v419
        %v480 = vunpack.c.l.b16 %v420
        %v481 = vunpack.c.h.b16 %v420
        %v482 = vunpack.c.l.b16 %v421
        %v483 = vunpack.c.h.b16 %v421
        %v484 = vunpack.c.l.b16 %v422
        %v485 = vunpack.c.h.b16 %v422
        %v486 = vunpack.c.l.b16 %v423
        %v487 = vunpack.c.h.b16 %v423
        %v488 = vunpack.c.l.b16 %v424
        %v489 = vunpack.c.h.b16 %v424
        %v490 = vunpack.c.l.b16 %v425
        %v491 = vunpack.c.h.b16 %v425
        %v492 = vunpack.c.l.b16 %v426
        %v493 = vunpack.c.h.b16 %v426
        %v494 = vunpack.c.l.b16 %v427
        %v495 = vunpack.c.h.b16 %v427
        %v496 = vunpack.c.l.b16 %v428
        %v497 = vunpack.c.h.b16 %v428
        %v498 = vunpack.c.l.b16 %v429
        %v499 = vunpack.c.h.b16 %v429
        %v500 = vunpack.c.l.b16 %v430
        %v501 = vunpack.c.h.b16 %v430
        %v502 = vunpack.c.l.b16 %v431
        %v503 = vunpack.c.h.b16 %v431
        %v504 = vpack.c.b16 %v474, %v472
        %v505 = vpack.c.b16 %v475, %v473
        %v506 = vpack.c.b16 %v478, %v476
        %v507 = vpack.c.b16 %v479, %v477
        %v508 = vpack.c.b16 %v482, %v480
        %v509 = vpack.c.b16 %v483, %v481
        %v510 = vpack.c.b16 %v486, %v484
        %v511 = vpack.c.b16 %v487, %v485
        %v512 = vpack.c.b16 %v490, %v488
        %v513 = vpack.c.b16 %v491, %v489
        %v514 = vpack.c.b16 %v494, %v492
        %v515 = vpack.c.b16 %v495, %v493
        %v516 = vpack.c.b16 %v498, %v496
        %v517 = vpack.c.b16 %v499, %v497
        %v518 = vpack.c.b16 %v502, %v500
        %v519 = vpack.c.b16 %v503, %v501
        %536 = vmatprep.subr.bf16.mxu0 %v505
        %537 = vmatpush1.bf16.msra.mxu0 %v504
        %538 = vmatprep.subr.bf16.mxu0 %v507
        %539 = vmatpush1.bf16.msra.mxu0 %v506
        %540 = vmatprep.subr.bf16.mxu0 %v509
        %541 = vmatpush1.bf16.msra.mxu0 %v508
        %542 = vmatprep.subr.bf16.mxu0 %v511
        %543 = vmatpush1.bf16.msra.mxu0 %v510
        %544 = vmatprep.subr.bf16.mxu0 %v513
        %545 = vmatpush1.bf16.msra.mxu0 %v512
        %546 = vmatprep.subr.bf16.mxu0 %v515
        %547 = vmatpush1.bf16.msra.mxu0 %v514
        %548 = vmatprep.subr.bf16.mxu0 %v517
        %549 = vmatpush1.bf16.msra.mxu0 %v516
        %550 = vmatprep.subr.bf16.mxu0 %v519
        %551 = vmatpush1.bf16.msra.mxu0 %v518
        %552 = vmatprep.subr.bf16.mxu0 0
        %553 = vmatpush1.bf16.msra.mxu0 0
        %554 = vmatprep.subr.bf16.mxu0 0
        %555 = vmatpush1.bf16.msra.mxu0 0
        %556 = vmatprep.subr.bf16.mxu0 0
        %557 = vmatpush1.bf16.msra.mxu0 0
        %558 = vmatprep.subr.bf16.mxu0 0
        %559 = vmatpush1.bf16.msra.mxu0 0
        %560 = vmatprep.subr.bf16.mxu0 0
        %561 = vmatpush1.bf16.msra.mxu0 0
        %562 = vmatprep.subr.bf16.mxu0 0
        %563 = vmatpush1.bf16.msra.mxu0 0
        %564 = vmatprep.subr.bf16.mxu0 0
        %565 = vmatpush1.bf16.msra.mxu0 0
        %566 = vmatprep.subr.bf16.mxu0 0
        %567 = vmatpush1.bf16.msra.mxu0 0
        %568 = vmatprep.mubr.bf16.mxu0 0
        %569 = vmatmul.mubr.bf16.gmra.mrb[0].mxu0 %v452
        %v570 = vpop.f32.mrb[0].mxu0
        %v571 = vadd.f32 %v437, %v570
        %v572 = vpop.f32.mrb[0].mxu0
        %v573 = vadd.f32 %v441, %v572
        %v574 = vpop.f32.mrb[0].mxu0
        %v575 = vadd.f32 %v437, %v574
        %v576 = vpop.f32.mrb[0].mxu0
        %v577 = vadd.f32 %v441, %v576
        %578 = vmatprep.mubr.bf16.mxu0 0
        %579 = vmatmul.mubr.bf16.gmra.mrb[0].mxu0 %v453
        %v580 = vpop.f32.mrb[0].mxu0
        %v581 = vadd.f32 %v437, %v580
        %v582 = vpop.f32.mrb[0].mxu0
        %v583 = vadd.f32 %v441, %v582
        %v584 = vpop.f32.mrb[0].mxu0
        %v585 = vadd.f32 %v437, %v584
        %v586 = vpop.f32.mrb[0].mxu0
        %v587 = vadd.f32 %v441, %v586
        %588 = vdwg.mxu0
        %v589 = vmax.f32 %v571, 0.0
        %v590 = vmax.f32 %v573, 0.0
        %v591 = vmax.f32 %v575, 0.0
        %v592 = vmax.f32 %v577, 0.0
        %v593 = vmax.f32 %v581, 0.0
        %v594 = vmax.f32 %v583, 0.0
        %v595 = vmax.f32 %v585, 0.0
        %v596 = vmax.f32 %v587, 0.0
        %v597 = vpack.c.bf16 %v591, %v589
        %v598 = vpack.c.bf16 %v592, %v590
        %v599 = vpack.c.bf16 %v595, %v593
        %v600 = vpack.c.bf16 %v596, %v594
        %v601 = vld [vmem:[#allocation7] sm:$0xf]
        %v602 = vld [vmem:[#allocation7 + $0x4] sm:$0xf]
        %v603 = vld [vmem:[#allocation7 + $0x8] sm:$0xf]
        %v604 = vld [vmem:[#allocation7 + $0xc] sm:$0xf]
        %v605 = vld [vmem:[#allocation7 + $0x10] sm:$0xf]
        %v606 = vld [vmem:[#allocation7 + $0x14] sm:$0xf]
        %v607 = vld [vmem:[#allocation7 + $0x18] sm:$0xf]
        %v608 = vld [vmem:[#allocation7 + $0x1c] sm:$0xf]
        %v609 = vld [vmem:[#allocation7 + $0x20] sm:$0xf]
        %v610 = vld [vmem:[#allocation7 + $0x24] sm:$0xf]
        %v611 = vld [vmem:[#allocation7 + $0x28] sm:$0xf]
        %v612 = vld [vmem:[#allocation7 + $0x2c] sm:$0xf]
        %v613 = vld [vmem:[#allocation7 + $0x30] sm:$0xf]
        %v614 = vld [vmem:[#allocation7 + $0x34] sm:$0xf]
        %v615 = vld [vmem:[#allocation7 + $0x38] sm:$0xf]
        %v616 = vld [vmem:[#allocation7 + $0x3c] sm:$0xf]
        %v617 = vld [vmem:[#allocation7 + $0x40] sm:$0xf]
        %v618 = vld [vmem:[#allocation7 + $0x44] sm:$0xf]
        %v619 = vld [vmem:[#allocation7 + $0x48] sm:$0xf]
        %v620 = vld [vmem:[#allocation7 + $0x4c] sm:$0xf]
        %v621 = vld [vmem:[#allocation7 + $0x50] sm:$0xf]
        %v622 = vld [vmem:[#allocation7 + $0x54] sm:$0xf]
        %v623 = vld [vmem:[#allocation7 + $0x58] sm:$0xf]
        %v624 = vld [vmem:[#allocation7 + $0x5c] sm:$0xf]
        %v625 = vld [vmem:[#allocation7 + $0x60] sm:$0xf]
        %v626 = vld [vmem:[#allocation7 + $0x64] sm:$0xf]
        %v627 = vld [vmem:[#allocation7 + $0x68] sm:$0xf]
        %v628 = vld [vmem:[#allocation7 + $0x6c] sm:$0xf]
        %v629 = vld [vmem:[#allocation7 + $0x70] sm:$0xf]
        %v630 = vld [vmem:[#allocation7 + $0x74] sm:$0xf]
        %v631 = vld [vmem:[#allocation7 + $0x78] sm:$0xf]
        %v632 = vld [vmem:[#allocation7 + $0x7c] sm:$0xf]
        %v633 = vld [vmem:[%s4] sm:$0x1]
        %v635 = vlaneseq
        %v636 = vshrl.u32 %v635, 7
        %v637 = vsub.s32 0, %v636
        %v638 = vrot.slane %v633, %v637
        %v672 = vunpack.c.l.b16 %v601
        %v673 = vunpack.c.l.b16 %v602
        %v674 = vunpack.c.l.b16 %v603
        %v675 = vunpack.c.l.b16 %v604
        %v676 = vunpack.c.l.b16 %v605
        %v677 = vunpack.c.l.b16 %v606
        %v678 = vunpack.c.l.b16 %v607
        %v679 = vunpack.c.l.b16 %v608
        %v680 = vunpack.c.l.b16 %v609
        %v681 = vunpack.c.l.b16 %v610
        %v682 = vunpack.c.l.b16 %v611
        %v683 = vunpack.c.l.b16 %v612
        %v684 = vunpack.c.l.b16 %v613
        %v685 = vunpack.c.l.b16 %v614
        %v686 = vunpack.c.l.b16 %v615
        %v687 = vunpack.c.l.b16 %v616
        %v688 = vunpack.c.l.b16 %v617
        %v689 = vunpack.c.l.b16 %v618
        %v690 = vunpack.c.l.b16 %v619
        %v691 = vunpack.c.l.b16 %v620
        %v692 = vunpack.c.l.b16 %v621
        %v693 = vunpack.c.l.b16 %v622
        %v694 = vunpack.c.l.b16 %v623
        %v695 = vunpack.c.l.b16 %v624
        %v696 = vunpack.c.l.b16 %v625
        %v697 = vunpack.c.l.b16 %v626
        %v698 = vunpack.c.l.b16 %v627
        %v699 = vunpack.c.l.b16 %v628
        %v700 = vunpack.c.l.b16 %v629
        %v701 = vunpack.c.l.b16 %v630
        %v702 = vunpack.c.l.b16 %v631
        %v703 = vunpack.c.l.b16 %v632
        %v704 = vpack.c.b16 %v673, %v672
        %v705 = vpack.c.b16 %v675, %v674
        %v706 = vpack.c.b16 %v677, %v676
        %v707 = vpack.c.b16 %v679, %v678
        %v708 = vpack.c.b16 %v681, %v680
        %v709 = vpack.c.b16 %v683, %v682
        %v710 = vpack.c.b16 %v685, %v684
        %v711 = vpack.c.b16 %v687, %v686
        %v712 = vpack.c.b16 %v689, %v688
        %v713 = vpack.c.b16 %v691, %v690
        %v714 = vpack.c.b16 %v693, %v692
        %v715 = vpack.c.b16 %v695, %v694
        %v716 = vpack.c.b16 %v697, %v696
        %v717 = vpack.c.b16 %v699, %v698
        %v718 = vpack.c.b16 %v701, %v700
        %v719 = vpack.c.b16 %v703, %v702
        %736 = vmatprep.subr.bf16.mxu0 0
        %737 = vmatpush1.bf16.msra.mxu0 %v704
        %738 = vmatprep.subr.bf16.mxu0 0
        %739 = vmatpush1.bf16.msra.mxu0 %v705
        %740 = vmatprep.subr.bf16.mxu0 0
        %741 = vmatpush1.bf16.msra.mxu0 %v706
        %742 = vmatprep.subr.bf16.mxu0 0
        %743 = vmatpush1.bf16.msra.mxu0 %v707
        %744 = vmatprep.subr.bf16.mxu0 0
        %745 = vmatpush1.bf16.msra.mxu0 %v708
        %746 = vmatprep.subr.bf16.mxu0 0
        %747 = vmatpush1.bf16.msra.mxu0 %v709
        %748 = vmatprep.subr.bf16.mxu0 0
        %749 = vmatpush1.bf16.msra.mxu0 %v710
        %750 = vmatprep.subr.bf16.mxu0 0
        %751 = vmatpush1.bf16.msra.mxu0 %v711
        %752 = vmatprep.subr.bf16.mxu0 0
        %753 = vmatpush1.bf16.msra.mxu0 %v712
        %754 = vmatprep.subr.bf16.mxu0 0
        %755 = vmatpush1.bf16.msra.mxu0 %v713
        %756 = vmatprep.subr.bf16.mxu0 0
        %757 = vmatpush1.bf16.msra.mxu0 %v714
        %758 = vmatprep.subr.bf16.mxu0 0
        %759 = vmatpush1.bf16.msra.mxu0 %v715
        %760 = vmatprep.subr.bf16.mxu0 0
        %761 = vmatpush1.bf16.msra.mxu0 %v716
        %762 = vmatprep.subr.bf16.mxu0 0
        %763 = vmatpush1.bf16.msra.mxu0 %v717
        %764 = vmatprep.subr.bf16.mxu0 0
        %765 = vmatpush1.bf16.msra.mxu0 %v718
        %766 = vmatprep.subr.bf16.mxu0 0
        %767 = vmatpush1.bf16.msra.mxu0 %v719
        %768 = vmatprep.mubr.bf16.mxu0 %v598
        %769 = vmatmul.mubr.bf16.gmra.mrb[0].mxu0 %v597
        %v770 = vpop.f32.mrb[0].mxu0
        %v771 = vadd.f32 %v638, %v770
        %v772 = vpop.f32.mrb[0].mxu0
        %v773 = vpop.f32.mrb[0].mxu0
        %v774 = vadd.f32 %v638, %v773
        %v775 = vpop.f32.mrb[0].mxu0
        %776 = vmatprep.mubr.bf16.mxu0 %v600
        %777 = vmatmul.mubr.bf16.gmra.mrb[0].mxu0 %v599
        %v778 = vpop.f32.mrb[0].mxu0
        %v779 = vadd.f32 %v638, %v778
        %v780 = vpop.f32.mrb[0].mxu0
        %v781 = vpop.f32.mrb[0].mxu0
        %v782 = vadd.f32 %v638, %v781
        %v783 = vpop.f32.mrb[0].mxu0
        %784 = vdwg.mxu0
        %v785 = vpack.c.bf16 %v774, %v771
        %v786 = vpack.c.bf16 %v782, %v779
        %v787 = vld [vmem:[#allocation8] sm:$0xff]
        %v788 = vld [vmem:[#allocation8 + $0x8] sm:$0xff]
        %v789 = vld [vmem:[#allocation8 + $0x10] sm:$0xff]
        %v790 = vld [vmem:[#allocation8 + $0x18] sm:$0xff]
        %v791 = vld [vmem:[#allocation8 + $0x20] sm:$0xff]
        %v792 = vld [vmem:[#allocation8 + $0x28] sm:$0xff]
        %v793 = vld [vmem:[#allocation8 + $0x30] sm:$0xff]
        %v794 = vld [vmem:[#allocation8 + $0x38] sm:$0xff]
        %v795 = vld [vmem:[#allocation8 + $0x40] sm:$0xff]
        %v796 = vld [vmem:[#allocation8 + $0x48] sm:$0xff]
        %v797 = vld [vmem:[#allocation8 + $0x50] sm:$0xff]
        %v798 = vld [vmem:[#allocation8 + $0x58] sm:$0xff]
        %v799 = vld [vmem:[#allocation8 + $0x60] sm:$0xff]
        %v800 = vld [vmem:[#allocation8 + $0x68] sm:$0xff]
        %v801 = vld [vmem:[#allocation8 + $0x70] sm:$0xff]
        %v802 = vld [vmem:[#allocation8 + $0x78] sm:$0xff]
        %v803 = vld [vmem:[%s6] sm:$0x3]
        %v805 = vlaneseq
        %v806 = vshrl.u32 %v805, 7
        %v807 = vsub.s32 0, %v806
        %v808 = vrot.slane %v803, %v807
        %v809 = vlaneseq
        %v810 = vshrl.u32 %v809, 7
        %v811 = vsub.s32 1, %v810
        %v812 = vrot.slane %v803, %v811
        %v831 = vunpack.c.l.b16 %v787
        %v832 = vunpack.c.h.b16 %v787
        %v833 = vunpack.c.l.b16 %v788
        %v834 = vunpack.c.h.b16 %v788
        %v835 = vunpack.c.l.b16 %v789
        %v836 = vunpack.c.h.b16 %v789
        %v837 = vunpack.c.l.b16 %v790
        %v838 = vunpack.c.h.b16 %v790
        %v839 = vunpack.c.l.b16 %v791
        %v840 = vunpack.c.h.b16 %v791
        %v841 = vunpack.c.l.b16 %v792
        %v842 = vunpack.c.h.b16 %v792
        %v843 = vunpack.c.l.b16 %v793
        %v844 = vunpack.c.h.b16 %v793
        %v845 = vunpack.c.l.b16 %v794
        %v846 = vunpack.c.h.b16 %v794
        %v847 = vunpack.c.l.b16 %v795
        %v848 = vunpack.c.h.b16 %v795
        %v849 = vunpack.c.l.b16 %v796
        %v850 = vunpack.c.h.b16 %v796
        %v851 = vunpack.c.l.b16 %v797
        %v852 = vunpack.c.h.b16 %v797
        %v853 = vunpack.c.l.b16 %v798
        %v854 = vunpack.c.h.b16 %v798
        %v855 = vunpack.c.l.b16 %v799
        %v856 = vunpack.c.h.b16 %v799
        %v857 = vunpack.c.l.b16 %v800
        %v858 = vunpack.c.h.b16 %v800
        %v859 = vunpack.c.l.b16 %v801
        %v860 = vunpack.c.h.b16 %v801
        %v861 = vunpack.c.l.b16 %v802
        %v862 = vunpack.c.h.b16 %v802
        %v863 = vpack.c.b16 %v833, %v831
        %v864 = vpack.c.b16 %v834, %v832
        %v865 = vpack.c.b16 %v837, %v835
        %v866 = vpack.c.b16 %v838, %v836
        %v867 = vpack.c.b16 %v841, %v839
        %v868 = vpack.c.b16 %v842, %v840
        %v869 = vpack.c.b16 %v845, %v843
        %v870 = vpack.c.b16 %v846, %v844
        %v871 = vpack.c.b16 %v849, %v847
        %v872 = vpack.c.b16 %v850, %v848
        %v873 = vpack.c.b16 %v853, %v851
        %v874 = vpack.c.b16 %v854, %v852
        %v875 = vpack.c.b16 %v857, %v855
        %v876 = vpack.c.b16 %v858, %v856
        %v877 = vpack.c.b16 %v861, %v859
        %v878 = vpack.c.b16 %v862, %v860
        %895 = vmatprep.subr.bf16.mxu0 %v864
        %896 = vmatpush1.bf16.msra.mxu0 %v863
        %897 = vmatprep.subr.bf16.mxu0 %v866
        %898 = vmatpush1.bf16.msra.mxu0 %v865
        %899 = vmatprep.subr.bf16.mxu0 %v868
        %900 = vmatpush1.bf16.msra.mxu0 %v867
        %901 = vmatprep.subr.bf16.mxu0 %v870
        %902 = vmatpush1.bf16.msra.mxu0 %v869
        %903 = vmatprep.subr.bf16.mxu0 %v872
        %904 = vmatpush1.bf16.msra.mxu0 %v871
        %905 = vmatprep.subr.bf16.mxu0 %v874
        %906 = vmatpush1.bf16.msra.mxu0 %v873
        %907 = vmatprep.subr.bf16.mxu0 %v876
        %908 = vmatpush1.bf16.msra.mxu0 %v875
        %909 = vmatprep.subr.bf16.mxu0 %v878
        %910 = vmatpush1.bf16.msra.mxu0 %v877
        %911 = vmatprep.subr.bf16.mxu0 0
        %912 = vmatpush1.bf16.msra.mxu0 0
        %913 = vmatprep.subr.bf16.mxu0 0
        %914 = vmatpush1.bf16.msra.mxu0 0
        %915 = vmatprep.subr.bf16.mxu0 0
        %916 = vmatpush1.bf16.msra.mxu0 0
        %917 = vmatprep.subr.bf16.mxu0 0
        %918 = vmatpush1.bf16.msra.mxu0 0
        %919 = vmatprep.subr.bf16.mxu0 0
        %920 = vmatpush1.bf16.msra.mxu0 0
        %921 = vmatprep.subr.bf16.mxu0 0
        %922 = vmatpush1.bf16.msra.mxu0 0
        %923 = vmatprep.subr.bf16.mxu0 0
        %924 = vmatpush1.bf16.msra.mxu0 0
        %925 = vmatprep.subr.bf16.mxu0 0
        %926 = vmatpush1.bf16.msra.mxu0 0
        %927 = vmatprep.mubr.bf16.mxu0 0
        %928 = vmatmul.mubr.bf16.gmra.mrb[0].mxu0 %v785
        %v929 = vpop.f32.mrb[0].mxu0
        %v930 = vadd.f32 %v808, %v929
        %v931 = vpop.f32.mrb[0].mxu0
        %v932 = vadd.f32 %v812, %v931
        %v933 = vpop.f32.mrb[0].mxu0
        %v934 = vadd.f32 %v808, %v933
        %v935 = vpop.f32.mrb[0].mxu0
        %v936 = vadd.f32 %v812, %v935
        %937 = vmatprep.mubr.bf16.mxu0 0
        %938 = vmatmul.mubr.bf16.gmra.mrb[0].mxu0 %v786
        %v939 = vpop.f32.mrb[0].mxu0
        %v940 = vadd.f32 %v808, %v939
        %v941 = vpop.f32.mrb[0].mxu0
        %v942 = vadd.f32 %v812, %v941
        %v943 = vpop.f32.mrb[0].mxu0
        %v944 = vadd.f32 %v808, %v943
        %v945 = vpop.f32.mrb[0].mxu0
        %v946 = vadd.f32 %v812, %v945
        %947 = vdwg.mxu0
        %v948 = vmax.f32 %v930, 0.0
        %v949 = vmax.f32 %v932, 0.0
        %v950 = vmax.f32 %v934, 0.0
        %v951 = vmax.f32 %v936, 0.0
        %v952 = vmax.f32 %v940, 0.0
        %v953 = vmax.f32 %v942, 0.0
        %v954 = vmax.f32 %v944, 0.0
        %v955 = vmax.f32 %v946, 0.0
        %v956 = vpack.c.bf16 %v950, %v948
        %v957 = vpack.c.bf16 %v951, %v949
        %v958 = vpack.c.bf16 %v954, %v952
        %v959 = vpack.c.bf16 %v955, %v953
        %v960 = vld [vmem:[#allocation10] sm:$0xf]
        %v961 = vld [vmem:[#allocation10 + $0x4] sm:$0xf]
        %v962 = vld [vmem:[#allocation10 + $0x8] sm:$0xf]
        %v963 = vld [vmem:[#allocation10 + $0xc] sm:$0xf]
        %v964 = vld [vmem:[#allocation10 + $0x10] sm:$0xf]
        %v965 = vld [vmem:[#allocation10 + $0x14] sm:$0xf]
        %v966 = vld [vmem:[#allocation10 + $0x18] sm:$0xf]
        %v967 = vld [vmem:[#allocation10 + $0x1c] sm:$0xf]
        %v968 = vld [vmem:[#allocation10 + $0x20] sm:$0xf]
        %v969 = vld [vmem:[#allocation10 + $0x24] sm:$0xf]
        %v970 = vld [vmem:[#allocation10 + $0x28] sm:$0xf]
        %v971 = vld [vmem:[#allocation10 + $0x2c] sm:$0xf]
        %v972 = vld [vmem:[#allocation10 + $0x30] sm:$0xf]
        %v973 = vld [vmem:[#allocation10 + $0x34] sm:$0xf]
        %v974 = vld [vmem:[#allocation10 + $0x38] sm:$0xf]
        %v975 = vld [vmem:[#allocation10 + $0x3c] sm:$0xf]
        %v976 = vld [vmem:[#allocation10 + $0x40] sm:$0xf]
        %v977 = vld [vmem:[#allocation10 + $0x44] sm:$0xf]
        %v978 = vld [vmem:[#allocation10 + $0x48] sm:$0xf]
        %v979 = vld [vmem:[#allocation10 + $0x4c] sm:$0xf]
        %v980 = vld [vmem:[#allocation10 + $0x50] sm:$0xf]
        %v981 = vld [vmem:[#allocation10 + $0x54] sm:$0xf]
        %v982 = vld [vmem:[#allocation10 + $0x58] sm:$0xf]
        %v983 = vld [vmem:[#allocation10 + $0x5c] sm:$0xf]
        %v984 = vld [vmem:[#allocation10 + $0x60] sm:$0xf]
        %v985 = vld [vmem:[#allocation10 + $0x64] sm:$0xf]
        %v986 = vld [vmem:[#allocation10 + $0x68] sm:$0xf]
        %v987 = vld [vmem:[#allocation10 + $0x6c] sm:$0xf]
        %v988 = vld [vmem:[#allocation10 + $0x70] sm:$0xf]
        %v989 = vld [vmem:[#allocation10 + $0x74] sm:$0xf]
        %v990 = vld [vmem:[#allocation10 + $0x78] sm:$0xf]
        %v991 = vld [vmem:[#allocation10 + $0x7c] sm:$0xf]
        %v992 = vld [vmem:[%s8] sm:$0x1]
        %v994 = vlaneseq
        %v995 = vshrl.u32 %v994, 7
        %v996 = vsub.s32 0, %v995
        %v997 = vrot.slane %v992, %v996
        %v1031 = vunpack.c.l.b16 %v960
        %v1032 = vunpack.c.l.b16 %v961
        %v1033 = vunpack.c.l.b16 %v962
        %v1034 = vunpack.c.l.b16 %v963
        %v1035 = vunpack.c.l.b16 %v964
        %v1036 = vunpack.c.l.b16 %v965
        %v1037 = vunpack.c.l.b16 %v966
        %v1038 = vunpack.c.l.b16 %v967
        %v1039 = vunpack.c.l.b16 %v968
        %v1040 = vunpack.c.l.b16 %v969
        %v1041 = vunpack.c.l.b16 %v970
        %v1042 = vunpack.c.l.b16 %v971
        %v1043 = vunpack.c.l.b16 %v972
        %v1044 = vunpack.c.l.b16 %v973
        %v1045 = vunpack.c.l.b16 %v974
        %v1046 = vunpack.c.l.b16 %v975
        %v1047 = vunpack.c.l.b16 %v976
        %v1048 = vunpack.c.l.b16 %v977
        %v1049 = vunpack.c.l.b16 %v978
        %v1050 = vunpack.c.l.b16 %v979
        %v1051 = vunpack.c.l.b16 %v980
        %v1052 = vunpack.c.l.b16 %v981
        %v1053 = vunpack.c.l.b16 %v982
        %v1054 = vunpack.c.l.b16 %v983
        %v1055 = vunpack.c.l.b16 %v984
        %v1056 = vunpack.c.l.b16 %v985
        %v1057 = vunpack.c.l.b16 %v986
        %v1058 = vunpack.c.l.b16 %v987
        %v1059 = vunpack.c.l.b16 %v988
        %v1060 = vunpack.c.l.b16 %v989
        %v1061 = vunpack.c.l.b16 %v990
        %v1062 = vunpack.c.l.b16 %v991
        %v1063 = vpack.c.b16 %v1032, %v1031
        %v1064 = vpack.c.b16 %v1034, %v1033
        %v1065 = vpack.c.b16 %v1036, %v1035
        %v1066 = vpack.c.b16 %v1038, %v1037
        %v1067 = vpack.c.b16 %v1040, %v1039
        %v1068 = vpack.c.b16 %v1042, %v1041
        %v1069 = vpack.c.b16 %v1044, %v1043
        %v1070 = vpack.c.b16 %v1046, %v1045
        %v1071 = vpack.c.b16 %v1048, %v1047
        %v1072 = vpack.c.b16 %v1050, %v1049
        %v1073 = vpack.c.b16 %v1052, %v1051
        %v1074 = vpack.c.b16 %v1054, %v1053
        %v1075 = vpack.c.b16 %v1056, %v1055
        %v1076 = vpack.c.b16 %v1058, %v1057
        %v1077 = vpack.c.b16 %v1060, %v1059
        %v1078 = vpack.c.b16 %v1062, %v1061
        %1095 = vmatprep.subr.bf16.mxu0 0
        %1096 = vmatpush1.bf16.msra.mxu0 %v1063
        %1097 = vmatprep.subr.bf16.mxu0 0
        %1098 = vmatpush1.bf16.msra.mxu0 %v1064
        %1099 = vmatprep.subr.bf16.mxu0 0
        %1100 = vmatpush1.bf16.msra.mxu0 %v1065
        %1101 = vmatprep.subr.bf16.mxu0 0
        %1102 = vmatpush1.bf16.msra.mxu0 %v1066
        %1103 = vmatprep.subr.bf16.mxu0 0
        %1104 = vmatpush1.bf16.msra.mxu0 %v1067
        %1105 = vmatprep.subr.bf16.mxu0 0
        %1106 = vmatpush1.bf16.msra.mxu0 %v1068
        %1107 = vmatprep.subr.bf16.mxu0 0
        %1108 = vmatpush1.bf16.msra.mxu0 %v1069
        %1109 = vmatprep.subr.bf16.mxu0 0
        %1110 = vmatpush1.bf16.msra.mxu0 %v1070
        %1111 = vmatprep.subr.bf16.mxu0 0
        %1112 = vmatpush1.bf16.msra.mxu0 %v1071
        %1113 = vmatprep.subr.bf16.mxu0 0
        %1114 = vmatpush1.bf16.msra.mxu0 %v1072
        %1115 = vmatprep.subr.bf16.mxu0 0
        %1116 = vmatpush1.bf16.msra.mxu0 %v1073
        %1117 = vmatprep.subr.bf16.mxu0 0
        %1118 = vmatpush1.bf16.msra.mxu0 %v1074
        %1119 = vmatprep.subr.bf16.mxu0 0
        %1120 = vmatpush1.bf16.msra.mxu0 %v1075
        %1121 = vmatprep.subr.bf16.mxu0 0
        %1122 = vmatpush1.bf16.msra.mxu0 %v1076
        %1123 = vmatprep.subr.bf16.mxu0 0
        %1124 = vmatpush1.bf16.msra.mxu0 %v1077
        %1125 = vmatprep.subr.bf16.mxu0 0
        %1126 = vmatpush1.bf16.msra.mxu0 %v1078
        %1127 = vmatprep.mubr.bf16.mxu0 %v957
        %1128 = vmatmul.mubr.bf16.gmra.mrb[0].mxu0 %v956
        %v1129 = vpop.f32.mrb[0].mxu0
        %v1130 = vadd.f32 %v997, %v1129
        %v1131 = vpop.f32.mrb[0].mxu0
        %v1132 = vpop.f32.mrb[0].mxu0
        %v1133 = vadd.f32 %v997, %v1132
        %v1134 = vpop.f32.mrb[0].mxu0
        %1135 = vmatprep.mubr.bf16.mxu0 %v959
        %1136 = vmatmul.mubr.bf16.gmra.mrb[0].mxu0 %v958
        %v1137 = vpop.f32.mrb[0].mxu0
        %v1138 = vadd.f32 %v997, %v1137
        %v1139 = vpop.f32.mrb[0].mxu0
        %v1140 = vpop.f32.mrb[0].mxu0
        %v1141 = vadd.f32 %v997, %v1140
        %v1142 = vpop.f32.mrb[0].mxu0
        %1143 = vdwg.mxu0
        %1144 = vst [vmem:[%s408] sm:$0xff] %v1130
        %1145 = vst [vmem:[%s408 + $0x8] sm:$0xff] %v1133
        %1146 = vst [vmem:[%s408 + $0x10] sm:$0xff] %v1138
        %1147 = vst [vmem:[%s408 + $0x18] sm:$0xff] %v1141
        %s1148 = sand.u32 %s230, 1
        %s1149 = scalar_lea.sflag [#allocation4], %s1148
        %s1150 = sand.u32 %s230, 1
        %s1151 = smul.addr %s1150, 32
        %s1152 = scalar_lea.vmem [#allocation11], %s1151
        // Predicated region
        $region77: #{tpu_custom_call.1} parent=55 // pred_check
          %p1153 = pneg %p240
        $region78: #{tpu_custom_call.1} parent=55 // pred_check_branch
          %1155 = sbr.rel (%p1153) target = $region80
        $region79: #{tpu_custom_call.1} parent=55 // pred_region
          %s1156 = smul.u32 4, %s28
          %s1158 = ssub.s32 512, 512
          %1159 = vsyncadd %s1149, %s1158
          %s1160 = smul.addr %s1156, 128
          %s1161 = scalar_lea.hbm %s9, %s1160
          %s1162 = sshll.u32 %s1152, 4
          %s1163 = int_to_ptr.vmem [resolvable:$true] %s1162
          %1168 = dma.vmem_to_hbm [thread:$0]  %s1163, 512, %s1161, %s1149, 128, 128, 8
        $region80: #{tpu_custom_call.1} parent=55 // pred_fallthru
          _
      $region56: #{tpu_custom_call.1} parent=5 // pred_fallthru
        _
      %p1169 = scmp.le.s32.totalorder 2, %s23
      // Predicated region
      $region81: #{tpu_custom_call.1} parent=5 // pred_check
        %p1170 = pneg %p1169
      $region82: #{tpu_custom_call.1} parent=5 // pred_check_branch
        %1172 = sbr.rel (%p1170) target = $region84
      $region83: #{tpu_custom_call.1} parent=5 // pred_region
        %s1173 = ssub.s32 %s23, 2
        // Predicated region
        $region85: #{tpu_custom_call.1} parent=83 // pred_check
          %p1174 = pneg %p246
        $region86: #{tpu_custom_call.1} parent=83 // pred_check_branch
          %1176 = sbr.rel (%p1174) target = $region88
        $region87: #{tpu_custom_call.1} parent=83 // pred_region
          %s1177 = sand.u32 %s231, 1
          %s1178 = scalar_lea.sflag [#allocation4], %s1177
          %s1179 = sand.u32 %s231, 1
          %s1180 = smul.addr %s1179, 32
          %s1181 = scalar_lea.vmem [#allocation11], %s1180
          %1182 = dma.done %s1178, 512
        $region88: #{tpu_custom_call.1} parent=83 // pred_fallthru
          _
      $region84: #{tpu_custom_call.1} parent=5 // pred_fallthru
        _
    $region6: #{tpu_custom_call.1} parent=1 // loop_footer
      %s27 = sadd.s32 1, %s23
    $region7: #{tpu_custom_call.1} parent=1 // loop_footer_branch
      %22 = sbr.rel target = $region3
    $region8: #{tpu_custom_call.1} parent=1 // loop_exit
      _
    %1183 = vsyncpa [#allocation3], 1
    %s1184 = scalar_lea.sflag [#allocation3], 1
    %1185 = vsyncpa %s1184, 1
    %1186 = vsyncpa [#allocation6], 1
    %1187 = vsyncpa [#allocation9], 1
    %1188 = vsyncpa [#allocation4], 1
    %s1189 = scalar_lea.sflag [#allocation4], 1
    %1190 = vsyncpa %s1189, 1

// kernel: tpu_custom_call.1
$region0: #{tpu_custom_call.1}
  #allocation0 [shape = 'u32[]', space=smem, size = 0x4, offset = 0x4, fixed_abs, tag = 'smem constant byte address 0x4 - core index']
  #allocation1 [shape = 'u32[144,128]{1,0:T(1,128)}', space=vmem, size = 0x12000, scoped, tag = 'internal scratch']
  %s0 = inlined_call_operand.hbm [shape: bf16[64,128], index: 0, kind: input, shape index: {}]
  %s1 = inlined_call_operand.hbm [shape: bf16[128,256], index: 1, kind: input, shape index: {}]
  %s2 = inlined_call_operand.vmem [shape: f32[1,256], index: 2, kind: input, shape index: {}]
  %s3 = inlined_call_operand.hbm [shape: bf16[256,128], index: 3, kind: input, shape index: {}]
  %s4 = inlined_call_operand.vmem [shape: f32[1,128], index: 4, kind: input, shape index: {}]
  %s5 = inlined_call_operand.hbm [shape: bf16[128,256], index: 5, kind: input, shape index: {}]
  %s6 = inlined_call_operand.vmem [shape: f32[1,256], index: 6, kind: input, shape index: {}]
  %s7 = inlined_call_operand.hbm [shape: bf16[256,128], index: 7, kind: input, shape index: {}]
  %s8 = inlined_call_operand.vmem [shape: f32[1,128], index: 8, kind: input, shape index: {}]
  %s9 = inlined_call_operand.hbm [shape: f32[64,128], index: 9, kind: output, shape index: {}]
  %s10 = sld [smem:[#allocation0]]
  $region89: #{tpu_custom_call.1} parent=0
    _
  %s12 = ssub.s32 1, %s10
  %s13 = scalar_select 0, %s12, %s10
  $region1: #{tpu_custom_call.1} parent=0
    #allocation2 [shape = 'u8[16384]{0}', space=vmem, size = 0x4000, scoped, tag = 'input window, operand 0']
    #allocation3 [shape = 's32[2]{0}', space=sflag, size = 0x8, scoped, tag = 'scoped memory for tpu_custom_call.1']
    #allocation4 [shape = 's32[2]{0}', space=sflag, size = 0x8, scoped, tag = 'scoped memory for tpu_custom_call.1']
    #allocation5 [shape = 'u8[65536]{0}', space=vmem, size = 0x10000, scoped, tag = 'input window, operand 1, single buffered']
    #allocation6 [shape = 's32[1]{0}', space=sflag, size = 0x4, scoped, tag = 'scoped memory for tpu_custom_call.1']
    #allocation7 [shape = 'u8[65536]{0}', space=vmem, size = 0x10000, scoped, tag = 'input window, operand 3, single buffered']
    #allocation8 [shape = 'u8[65536]{0}', space=vmem, size = 0x10000, scoped, tag = 'input window, operand 5, single buffered']
    #allocation9 [shape = 's32[1]{0}', space=sflag, size = 0x4, scoped, tag = 'scoped memory for tpu_custom_call.1']
    #allocation10 [shape = 'u8[65536]{0}', space=vmem, size = 0x10000, scoped, tag = 'input window, operand 7, single buffered']
    #allocation11 [shape = 'u8[32768]{0}', space=vmem, size = 0x8000, scoped, tag = 'output window, operand 0']
    %14 = vsyncpa [#allocation3], 0
    %s15 = scalar_lea.sflag [#allocation3], 1
    %16 = vsyncpa %s15, 0
    %17 = vsyncpa [#allocation6], 0
    %18 = vsyncpa [#allocation9], 0
    %19 = vsyncpa [#allocation4], 0
    %s20 = scalar_lea.sflag [#allocation4], 1
    %21 = vsyncpa %s20, 0
    loop: start=0, step=1, limit=4
    $region2: #{tpu_custom_call.1} parent=1 // loop_pre_header
      _
    $region3: #{tpu_custom_call.1} parent=1 // loop_header
      %s23 = sphi 0, %s27
      %p24 = scmp.ge.s32.totalorder %s23, 4
      %s33 = sphi 0, %s35
      %s36 = sphi 0, %s33
      %s37 = sphi 0, %s36
      %s53 = sphi 0, %s37
      %s57 = sphi 0, %s57
      %s59 = sphi 0, %s57
      %s60 = sphi 0, %s59
      %s74 = sphi 0, %s60
      %s78 = sphi 0, %s78
      %s80 = sphi 0, %s78
      %s81 = sphi 0, %s80
      %s95 = sphi 0, %s81
      %s99 = sphi 0, %s99
      %s101 = sphi 0, %s99
      %s102 = sphi 0, %s101
      %s116 = sphi 0, %s102
      %s120 = sphi 0, %s120
      %s122 = sphi 0, %s120
      %s123 = sphi 0, %s122
      %s137 = sphi 0, %s123
      %s141 = sphi 0, %s141
      %s143 = sphi 0, %s141
      %s144 = sphi 0, %s143
      %s158 = sphi 0, %s144
      %s162 = sphi 0, %s162
      %s164 = sphi 0, %s162
      %s165 = sphi 0, %s164
      %s179 = sphi 0, %s165
      %s183 = sphi 0, %s183
      %s185 = sphi 0, %s183
      %s186 = sphi 0, %s185
      %s200 = sphi 0, %s186
      %s204 = sphi 0, %s204
      %s206 = sphi 0, %s204
      %s207 = sphi 0, %s206
      %s221 = sphi 0, %s207
      %s227 = sphi 0, %s229
      %s230 = sphi 0, %s227
      %s231 = sphi 0, %s230
      %s247 = sphi 0, %s231
    $region4: #{tpu_custom_call.1} parent=1 // loop_header_branch
      %26 = sbr.rel (%p24) target = $region8
    $region5: #{tpu_custom_call.1} parent=1 // loop_body
      %s28 = ssub.s32 %s23, 1
      %s29 = ssub.s32 %s23, 2
      %s30 = sadd.s32 %s23, 1
      %s31 = ssub.s32 %s23, %s30
      %p32 = scmp.eq.s32.totalorder %s31, 0
      %s34 = sadd.s32 %s33, 1
      %s35 = scalar_select %p32, %s33, %s34
      %p38 = pneg %p32
      %p39 = scmp.eq.s32.totalorder %s23, 1
      %p40 = por %p38, %p39
      %p41 = scmp.ne.s32.totalorder %s33, %s36
      %p42 = scmp.eq.s32.totalorder %s23, 0
      %p43 = por %p41, %p42
      %p44 = scmp.ne.s32.totalorder %s33, %s36
      %p45 = scmp.eq.s32.totalorder %s28, 1
      %p46 = por %p44, %p45
      %p47 = scmp.ne.s32.totalorder %s36, %s37
      %p48 = scmp.eq.s32.totalorder %s28, 0
      %p49 = por %p47, %p48
      %p50 = scmp.ne.s32.totalorder %s36, %s37
      %p51 = scmp.eq.s32.totalorder %s29, 1
      %p52 = por %p50, %p51
      %p54 = scmp.ne.s32.totalorder %s37, %s53
      %p55 = scmp.eq.s32.totalorder %s29, 0
      %p56 = por %p54, %p55
      %s58 = sadd.s32 %s57, 1
      %p61 = scmp.eq.s32.totalorder %s23, 1
      %p62 = scmp.ne.s32.totalorder %s57, %s59
      %p63 = scmp.eq.s32.totalorder %s23, 0
      %p64 = por %p62, %p63
      %p65 = scmp.ne.s32.totalorder %s57, %s59
      %p66 = scmp.eq.s32.totalorder %s28, 1
      %p67 = por %p65, %p66
      %p68 = scmp.ne.s32.totalorder %s59, %s60
      %p69 = scmp.eq.s32.totalorder %s28, 0
      %p70 = por %p68, %p69
      %p71 = scmp.ne.s32.totalorder %s59, %s60
      %p72 = scmp.eq.s32.totalorder %s29, 1
      %p73 = por %p71, %p72
      %p75 = scmp.ne.s32.totalorder %s60, %s74
      %p76 = scmp.eq.s32.totalorder %s29, 0
      %p77 = por %p75, %p76
      %s79 = sadd.s32 %s78, 1
      %p82 = scmp.eq.s32.totalorder %s23, 1
      %p83 = scmp.ne.s32.totalorder %s78, %s80
      %p84 = scmp.eq.s32.totalorder %s23, 0
      %p85 = por %p83, %p84
      %p86 = scmp.ne.s32.totalorder %s78, %s80
      %p87 = scmp.eq.s32.totalorder %s28, 1
      %p88 = por %p86, %p87
      %p89 = scmp.ne.s32.totalorder %s80, %s81
      %p90 = scmp.eq.s32.totalorder %s28, 0
      %p91 = por %p89, %p90
      %p92 = scmp.ne.s32.totalorder %s80, %s81
      %p93 = scmp.eq.s32.totalorder %s29, 1
      %p94 = por %p92, %p93
      %p96 = scmp.ne.s32.totalorder %s81, %s95
      %p97 = scmp.eq.s32.totalorder %s29, 0
      %p98 = por %p96, %p97
      %s100 = sadd.s32 %s99, 1
      %p103 = scmp.eq.s32.totalorder %s23, 1
      %p104 = scmp.ne.s32.totalorder %s99, %s101
      %p105 = scmp.eq.s32.totalorder %s23, 0
      %p106 = por %p104, %p105
      %p107 = scmp.ne.s32.totalorder %s99, %s101
      %p108 = scmp.eq.s32.totalorder %s28, 1
      %p109 = por %p107, %p108
      %p110 = scmp.ne.s32.totalorder %s101, %s102
      %p111 = scmp.eq.s32.totalorder %s28, 0
      %p112 = por %p110, %p111
      %p113 = scmp.ne.s32.totalorder %s101, %s102
      %p114 = scmp.eq.s32.totalorder %s29, 1
      %p115 = por %p113, %p114
      %p117 = scmp.ne.s32.totalorder %s102, %s116
      %p118 = scmp.eq.s32.totalorder %s29, 0
      %p119 = por %p117, %p118
      %s121 = sadd.s32 %s120, 1
      %p124 = scmp.eq.s32.totalorder %s23, 1
      %p125 = scmp.ne.s32.totalorder %s120, %s122
      %p126 = scmp.eq.s32.totalorder %s23, 0
      %p127 = por %p125, %p126
      %p128 = scmp.ne.s32.totalorder %s120, %s122
      %p129 = scmp.eq.s32.totalorder %s28, 1
      %p130 = por %p128, %p129
      %p131 = scmp.ne.s32.totalorder %s122, %s123
      %p132 = scmp.eq.s32.totalorder %s28, 0
      %p133 = por %p131, %p132
      %p134 = scmp.ne.s32.totalorder %s122, %s123
      %p135 = scmp.eq.s32.totalorder %s29, 1
      %p136 = por %p134, %p135
      %p138 = scmp.ne.s32.totalorder %s123, %s137
      %p139 = scmp.eq.s32.totalorder %s29, 0
      %p140 = por %p138, %p139
      %s142 = sadd.s32 %s141, 1
      %p145 = scmp.eq.s32.totalorder %s23, 1
      %p146 = scmp.ne.s32.totalorder %s141, %s143
      %p147 = scmp.eq.s32.totalorder %s23, 0
      %p148 = por %p146, %p147
      %p149 = scmp.ne.s32.totalorder %s141, %s143
      %p150 = scmp.eq.s32.totalorder %s28, 1
      %p151 = por %p149, %p150
      %p152 = scmp.ne.s32.totalorder %s143, %s144
      %p153 = scmp.eq.s32.totalorder %s28, 0
      %p154 = por %p152, %p153
      %p155 = scmp.ne.s32.totalorder %s143, %s144
      %p156 = scmp.eq.s32.totalorder %s29, 1
      %p157 = por %p155, %p156
      %p159 = scmp.ne.s32.totalorder %s144, %s158
      %p160 = scmp.eq.s32.totalorder %s29, 0
      %p161 = por %p159, %p160
      %s163 = sadd.s32 %s162, 1
      %p166 = scmp.eq.s32.totalorder %s23, 1
      %p167 = scmp.ne.s32.totalorder %s162, %s164
      %p168 = scmp.eq.s32.totalorder %s23, 0
      %p169 = por %p167, %p168
      %p170 = scmp.ne.s32.totalorder %s162, %s164
      %p171 = scmp.eq.s32.totalorder %s28, 1
      %p172 = por %p170, %p171
      %p173 = scmp.ne.s32.totalorder %s164, %s165
      %p174 = scmp.eq.s32.totalorder %s28, 0
      %p175 = por %p173, %p174
      %p176 = scmp.ne.s32.totalorder %s164, %s165
      %p177 = scmp.eq.s32.totalorder %s29, 1
      %p178 = por %p176, %p177
      %p180 = scmp.ne.s32.totalorder %s165, %s179
      %p181 = scmp.eq.s32.totalorder %s29, 0
      %p182 = por %p180, %p181
      %s184 = sadd.s32 %s183, 1
      %p187 = scmp.eq.s32.totalorder %s23, 1
      %p188 = scmp.ne.s32.totalorder %s183, %s185
      %p189 = scmp.eq.s32.totalorder %s23, 0
      %p190 = por %p188, %p189
      %p191 = scmp.ne.s32.totalorder %s183, %s185
      %p192 = scmp.eq.s32.totalorder %s28, 1
      %p193 = por %p191, %p192
      %p194 = scmp.ne.s32.totalorder %s185, %s186
      %p195 = scmp.eq.s32.totalorder %s28, 0
      %p196 = por %p194, %p195
      %p197 = scmp.ne.s32.totalorder %s185, %s186
      %p198 = scmp.eq.s32.totalorder %s29, 1
      %p199 = por %p197, %p198
      %p201 = scmp.ne.s32.totalorder %s186, %s200
      %p202 = scmp.eq.s32.totalorder %s29, 0
      %p203 = por %p201, %p202
      %s205 = sadd.s32 %s204, 1
      %p208 = scmp.eq.s32.totalorder %s23, 1
      %p209 = scmp.ne.s32.totalorder %s204, %s206
      %p210 = scmp.eq.s32.totalorder %s23, 0
      %p211 = por %p209, %p210
      %p212 = scmp.ne.s32.totalorder %s204, %s206
      %p213 = scmp.eq.s32.totalorder %s28, 1
      %p214 = por %p212, %p213
      %p215 = scmp.ne.s32.totalorder %s206, %s207
      %p216 = scmp.eq.s32.totalorder %s28, 0
      %p217 = por %p215, %p216
      %p218 = scmp.ne.s32.totalorder %s206, %s207
      %p219 = scmp.eq.s32.totalorder %s29, 1
      %p220 = por %p218, %p219
      %p222 = scmp.ne.s32.totalorder %s207, %s221
      %p223 = scmp.eq.s32.totalorder %s29, 0
      %p224 = por %p222, %p223
      %s225 = ssub.s32 %s23, %s30
      %p226 = scmp.eq.s32.totalorder %s225, 0
      %s228 = sadd.s32 %s227, 1
      %s229 = scalar_select %p226, %s227, %s228
      %p232 = pneg %p226
      %p233 = scmp.eq.s32.totalorder %s23, 1
      %p234 = por %p232, %p233
      %p235 = scmp.ne.s32.totalorder %s227, %s230
      %p236 = scmp.eq.s32.totalorder %s23, 0
      %p237 = por %p235, %p236
      %p238 = scmp.ne.s32.totalorder %s227, %s230
      %p239 = scmp.eq.s32.totalorder %s28, 1
      %p240 = por %p238, %p239
      %p241 = scmp.ne.s32.totalorder %s230, %s231
      %p242 = scmp.eq.s32.totalorder %s28, 0
      %p243 = por %p241, %p242
      %p244 = scmp.ne.s32.totalorder %s230, %s231
      %p245 = scmp.eq.s32.totalorder %s29, 1
      %p246 = por %p244, %p245
      %p248 = scmp.ne.s32.totalorder %s231, %s247
      %p249 = scmp.eq.s32.totalorder %s29, 0
      %p250 = por %p248, %p249
      %p251 = scmp.le.s32.totalorder 1, %s23
      %p252 = scmp.lt.s32.totalorder %s23, 3
      %p253 = pnand %p251, %p252
      %p254 = pneg %p253
      // Predicated region
      $region9: #{tpu_custom_call.1} parent=5 // pred_check
        _
      $region10: #{tpu_custom_call.1} parent=5 // pred_check_branch
        %256 = sbr.rel (%p253) target = $region12
      $region11: #{tpu_custom_call.1} parent=5 // pred_region
        %s257 = ssub.s32 %s23, 1
        // Predicated region
        $region13: #{tpu_custom_call.1} parent=11 // pred_check
          %p258 = pneg %p70
        $region14: #{tpu_custom_call.1} parent=11 // pred_check_branch
          %260 = sbr.rel (%p258) target = $region16
        $region15: #{tpu_custom_call.1} parent=11 // pred_region
          %s262 = ssub.s32 2048, 2048
          %263 = vsyncadd [#allocation6], %s262
          %s264 = sshll.u32 [#allocation5], 4
          %s265 = int_to_ptr.vmem [resolvable:$true] %s264
          %270 = dma.hbm_to_vmem [thread:$0]  %s1, 2048, %s265, [#allocation6], 128, 128, 8
        $region16: #{tpu_custom_call.1} parent=11 // pred_fallthru
          _
        // Predicated region
        $region17: #{tpu_custom_call.1} parent=11 // pred_check
          %p271 = pneg %p91
        $region18: #{tpu_custom_call.1} parent=11 // pred_check_branch
          %273 = sbr.rel (%p271) target = $region20
        $region19: #{tpu_custom_call.1} parent=11 // pred_region
          _
        $region20: #{tpu_custom_call.1} parent=11 // pred_fallthru
          _
        // Predicated region
        $region21: #{tpu_custom_call.1} parent=11 // pred_check
          %p274 = pneg %p112
        $region22: #{tpu_custom_call.1} parent=11 // pred_check_branch
          %276 = sbr.rel (%p274) target = $region24
        $region23: #{tpu_custom_call.1} parent=11 // pred_region
          %s278 = ssub.s32 2048, 2048
          %279 = vsyncadd [#allocation6], %s278
          %s280 = sshll.u32 [#allocation7], 4
          %s281 = int_to_ptr.vmem [resolvable:$true] %s280
          %286 = dma.hbm_to_vmem [thread:$0]  %s3, 2048, %s281, [#allocation6], 64, 64, 4
        $region24: #{tpu_custom_call.1} parent=11 // pred_fallthru
          _
        // Predicated region
        $region25: #{tpu_custom_call.1} parent=11 // pred_check
          %p287 = pneg %p133
        $region26: #{tpu_custom_call.1} parent=11 // pred_check_branch
          %289 = sbr.rel (%p287) target = $region28
        $region27: #{tpu_custom_call.1} parent=11 // pred_region
          _
        $region28: #{tpu_custom_call.1} parent=11 // pred_fallthru
          _
        // Predicated region
        $region29: #{tpu_custom_call.1} parent=11 // pred_check
          %p290 = pneg %p154
        $region30: #{tpu_custom_call.1} parent=11 // pred_check_branch
          %292 = sbr.rel (%p290) target = $region32
        $region31: #{tpu_custom_call.1} parent=11 // pred_region
          %s294 = ssub.s32 2048, 2048
          %295 = vsyncadd [#allocation9], %s294
          %s296 = sshll.u32 [#allocation8], 4
          %s297 = int_to_ptr.vmem [resolvable:$true] %s296
          %302 = dma.hbm_to_vmem [thread:$0]  %s5, 2048, %s297, [#allocation9], 128, 128, 8
        $region32: #{tpu_custom_call.1} parent=11 // pred_fallthru
          _
        // Predicated region
        $region33: #{tpu_custom_call.1} parent=11 // pred_check
          %p303 = pneg %p175
        $region34: #{tpu_custom_call.1} parent=11 // pred_check_branch
          %305 = sbr.rel (%p303) target = $region36
        $region35: #{tpu_custom_call.1} parent=11 // pred_region
          _
        $region36: #{tpu_custom_call.1} parent=11 // pred_fallthru
          _
        // Predicated region
        $region37: #{tpu_custom_call.1} parent=11 // pred_check
          %p306 = pneg %p196
        $region38: #{tpu_custom_call.1} parent=11 // pred_check_branch
          %308 = sbr.rel (%p306) target = $region40
        $region39: #{tpu_custom_call.1} parent=11 // pred_region
          %s310 = ssub.s32 2048, 2048
          %311 = vsyncadd [#allocation9], %s310
          %s312 = sshll.u32 [#allocation10], 4
          %s313 = int_to_ptr.vmem [resolvable:$true] %s312
          %318 = dma.hbm_to_vmem [thread:$0]  %s7, 2048, %s313, [#allocation9], 64, 64, 4
        $region40: #{tpu_custom_call.1} parent=11 // pred_fallthru
          _
        // Predicated region
        $region41: #{tpu_custom_call.1} parent=11 // pred_check
          %p319 = pneg %p217
        $region42: #{tpu_custom_call.1} parent=11 // pred_check_branch
          %321 = sbr.rel (%p319) target = $region44
        $region43: #{tpu_custom_call.1} parent=11 // pred_region
          _
        $region44: #{tpu_custom_call.1} parent=11 // pred_fallthru
          _
      $region12: #{tpu_custom_call.1} parent=5 // pred_fallthru
        _
      %p322 = scmp.lt.s32.totalorder %s23, 2
      // Predicated region
      $region45: #{tpu_custom_call.1} parent=5 // pred_check
        %p323 = pneg %p322
      $region46: #{tpu_custom_call.1} parent=5 // pred_check_branch
        %325 = sbr.rel (%p323) target = $region48
      $region47: #{tpu_custom_call.1} parent=5 // pred_region
        // Predicated region
        $region49: #{tpu_custom_call.1} parent=47 // pred_check
          %p326 = pneg %p43
        $region50: #{tpu_custom_call.1} parent=47 // pred_check_branch
          %328 = sbr.rel (%p326) target = $region52
        $region51: #{tpu_custom_call.1} parent=47 // pred_region
          %s329 = sand.u32 %s33, 1
          %s330 = scalar_lea.sflag [#allocation3], %s329
          %s331 = sand.u32 %s33, 1
          %s332 = smul.addr %s331, 16
          %s333 = scalar_lea.vmem [#allocation2], %s332
          %s334 = smul.u32 4, %s23
          %s336 = ssub.s32 256, 256
          %337 = vsyncadd %s330, %s336
          %s338 = smul.addr %s334, 64
          %s339 = scalar_lea.hbm %s0, %s338
          %s340 = sshll.u32 %s333, 4
          %s341 = int_to_ptr.vmem [resolvable:$true] %s340
          %346 = dma.hbm_to_vmem [thread:$0]  %s339, 256, %s341, %s330, 64, 64, 4
        $region52: #{tpu_custom_call.1} parent=47 // pred_fallthru
          _
      $region48: #{tpu_custom_call.1} parent=5 // pred_fallthru
        _
      %p347 = scmp.le.s32.totalorder 1, %s23
      %p348 = scmp.lt.s32.totalorder %s23, 3
      %p349 = pnand %p347, %p348
      %p350 = pneg %p349
      // Predicated region
      $region53: #{tpu_custom_call.1} parent=5 // pred_check
        _
      $region54: #{tpu_custom_call.1} parent=5 // pred_check_branch
        %352 = sbr.rel (%p349) target = $region56
      $region55: #{tpu_custom_call.1} parent=5 // pred_region
        %s353 = ssub.s32 %s23, 1
        %s354 = sand.u32 %s36, 1
        %s355 = scalar_lea.sflag [#allocation3], %s354
        %s356 = sand.u32 %s36, 1
        %s357 = smul.addr %s356, 16
        %s358 = scalar_lea.vmem [#allocation2], %s357
        // Predicated region
        $region57: #{tpu_custom_call.1} parent=55 // pred_check
          %p359 = pneg %p49
        $region58: #{tpu_custom_call.1} parent=55 // pred_check_branch
          %361 = sbr.rel (%p359) target = $region60
        $region59: #{tpu_custom_call.1} parent=55 // pred_region
          %362 = dma.done %s355, 256
        $region60: #{tpu_custom_call.1} parent=55 // pred_fallthru
          _
        // Predicated region
        $region61: #{tpu_custom_call.1} parent=55 // pred_check
          %p363 = pneg %p70
        $region62: #{tpu_custom_call.1} parent=55 // pred_check_branch
          %365 = sbr.rel (%p363) target = $region64
        $region63: #{tpu_custom_call.1} parent=55 // pred_region
          %366 = dma.done [#allocation6], 2048
        $region64: #{tpu_custom_call.1} parent=55 // pred_fallthru
          _
        // Predicated region
        $region65: #{tpu_custom_call.1} parent=55 // pred_check
          %p367 = pneg %p112
        $region66: #{tpu_custom_call.1} parent=55 // pred_check_branch
          %369 = sbr.rel (%p367) target = $region68
        $region67: #{tpu_custom_call.1} parent=55 // pred_region
          %370 = dma.done [#allocation6], 2048
        $region68: #{tpu_custom_call.1} parent=55 // pred_fallthru
          _
        // Predicated region
        $region69: #{tpu_custom_call.1} parent=55 // pred_check
          %p371 = pneg %p154
        $region70: #{tpu_custom_call.1} parent=55 // pred_check_branch
          %373 = sbr.rel (%p371) target = $region72
        $region71: #{tpu_custom_call.1} parent=55 // pred_region
          %374 = dma.done [#allocation9], 2048
        $region72: #{tpu_custom_call.1} parent=55 // pred_fallthru
          _
        // Predicated region
        $region73: #{tpu_custom_call.1} parent=55 // pred_check
          %p375 = pneg %p196
        $region74: #{tpu_custom_call.1} parent=55 // pred_check_branch
          %377 = sbr.rel (%p375) target = $region76
        $region75: #{tpu_custom_call.1} parent=55 // pred_region
          %378 = dma.done [#allocation9], 2048
        $region76: #{tpu_custom_call.1} parent=55 // pred_fallthru
          _
        %s379 = sand.u32 %s36, 1
        %s380 = scalar_lea.sflag [#allocation3], %s379
        %s381 = sand.u32 %s36, 1
        %s382 = smul.addr %s381, 16
        %s383 = scalar_lea.vmem [#allocation2], %s382
        %p384 = pneg %p49
        %p385 = pneg %p46
        %p386 = pneg %p70
        %p387 = pneg %p67
        %p388 = pneg %p91
        %p389 = pneg %p88
        %p390 = pneg %p112
        %p391 = pneg %p109
        %p392 = pneg %p133
        %p393 = pneg %p130
        %p394 = pneg %p154
        %p395 = pneg %p151
        %p396 = pneg %p175
        %p397 = pneg %p172
        %p398 = pneg %p196
        %p399 = pneg %p193
        %p400 = pneg %p217
        %p401 = pneg %p214
        %p402 = pneg %p243
        %p403 = pneg %p240
        %s404 = sand.u32 %s230, 1
        %s405 = scalar_lea.sflag [#allocation4], %s404
        %s406 = sand.u32 %s230, 1
        %s407 = smul.addr %s406, 32
        %s408 = scalar_lea.vmem [#allocation11], %s407
        %s409 = smul.u32 4, %s28
        %s410 = smul.u32 4, %s28
        %v412 = vld [vmem:[%s358] sm:$0xf]
        %v413 = vld [vmem:[%s358 + $0x4] sm:$0xf]
        %v414 = vld [vmem:[%s358 + $0x8] sm:$0xf]
        %v415 = vld [vmem:[%s358 + $0xc] sm:$0xf]
        %v416 = vld [vmem:[#allocation5] sm:$0xff]
        %v417 = vld [vmem:[#allocation5 + $0x8] sm:$0xff]
        %v418 = vld [vmem:[#allocation5 + $0x10] sm:$0xff]
        %v419 = vld [vmem:[#allocation5 + $0x18] sm:$0xff]
        %v420 = vld [vmem:[#allocation5 + $0x20] sm:$0xff]
        %v421 = vld [vmem:[#allocation5 + $0x28] sm:$0xff]
        %v422 = vld [vmem:[#allocation5 + $0x30] sm:$0xff]
        %v423 = vld [vmem:[#allocation5 + $0x38] sm:$0xff]
        %v424 = vld [vmem:[#allocation5 + $0x40] sm:$0xff]
        %v425 = vld [vmem:[#allocation5 + $0x48] sm:$0xff]
        %v426 = vld [vmem:[#allocation5 + $0x50] sm:$0xff]
        %v427 = vld [vmem:[#allocation5 + $0x58] sm:$0xff]
        %v428 = vld [vmem:[#allocation5 + $0x60] sm:$0xff]
        %v429 = vld [vmem:[#allocation5 + $0x68] sm:$0xff]
        %v430 = vld [vmem:[#allocation5 + $0x70] sm:$0xff]
        %v431 = vld [vmem:[#allocation5 + $0x78] sm:$0xff]
        %v432 = vld [vmem:[%s2] sm:$0x3]
        %v434 = vlaneseq
        %v435 = vshrl.u32 %v434, 7
        %v436 = vsub.s32 0, %v435
        %v437 = vrot.slane %v432, %v436
        %v438 = vlaneseq
        %v439 = vshrl.u32 %v438, 7
        %v440 = vsub.s32 1, %v439
        %v441 = vrot.slane %v432, %v440
        %v448 = vunpack.c.l.b16 %v412
        %v449 = vunpack.c.l.b16 %v413
        %v450 = vunpack.c.l.b16 %v414
        %v451 = vunpack.c.l.b16 %v415
        %v452 = vpack.c.b16 %v449, %v448
        %v453 = vpack.c.b16 %v451, %v450
        %v472 = vunpack.c.l.b16 %v416
        %v473 = vunpack.c.h.b16 %v416
        %v474 = vunpack.c.l.b16 %v417
        %v475 = vunpack.c.h.b16 %v417
        %v476 = vunpack.c.l.b16 %v418
        %v477 = vunpack.c.h.b16 %v418
        %v478 = vunpack.c.l.b16 %v419
        %v479 = vunpack.c.h.b16 %v419
        %v480 = vunpack.c.l.b16 %v420
        %v481 = vunpack.c.h.b16 %v420
        %v482 = vunpack.c.l.b16 %v421
        %v483 = vunpack.c.h.b16 %v421
        %v484 = vunpack.c.l.b16 %v422
        %v485 = vunpack.c.h.b16 %v422
        %v486 = vunpack.c.l.b16 %v423
        %v487 = vunpack.c.h.b16 %v423
        %v488 = vunpack.c.l.b16 %v424
        %v489 = vunpack.c.h.b16 %v424
        %v490 = vunpack.c.l.b16 %v425
        %v491 = vunpack.c.h.b16 %v425
        %v492 = vunpack.c.l.b16 %v426
        %v493 = vunpack.c.h.b16 %v426
        %v494 = vunpack.c.l.b16 %v427
        %v495 = vunpack.c.h.b16 %v427
        %v496 = vunpack.c.l.b16 %v428
        %v497 = vunpack.c.h.b16 %v428
        %v498 = vunpack.c.l.b16 %v429
        %v499 = vunpack.c.h.b16 %v429
        %v500 = vunpack.c.l.b16 %v430
        %v501 = vunpack.c.h.b16 %v430
        %v502 = vunpack.c.l.b16 %v431
        %v503 = vunpack.c.h.b16 %v431
        %v504 = vpack.c.b16 %v474, %v472
        %v505 = vpack.c.b16 %v475, %v473
        %v506 = vpack.c.b16 %v478, %v476
        %v507 = vpack.c.b16 %v479, %v477
        %v508 = vpack.c.b16 %v482, %v480
        %v509 = vpack.c.b16 %v483, %v481
        %v510 = vpack.c.b16 %v486, %v484
        %v511 = vpack.c.b16 %v487, %v485
        %v512 = vpack.c.b16 %v490, %v488
        %v513 = vpack.c.b16 %v491, %v489
        %v514 = vpack.c.b16 %v494, %v492
        %v515 = vpack.c.b16 %v495, %v493
        %v516 = vpack.c.b16 %v498, %v496
        %v517 = vpack.c.b16 %v499, %v497
        %v518 = vpack.c.b16 %v502, %v500
        %v519 = vpack.c.b16 %v503, %v501
        %536 = vmatprep.subr.bf16.mxu0 %v505
        %537 = vmatpush1.bf16.msra.mxu0 %v504
        %538 = vmatprep.subr.bf16.mxu0 %v507
        %539 = vmatpush1.bf16.msra.mxu0 %v506
        %540 = vmatprep.subr.bf16.mxu0 %v509
        %541 = vmatpush1.bf16.msra.mxu0 %v508
        %542 = vmatprep.subr.bf16.mxu0 %v511
        %543 = vmatpush1.bf16.msra.mxu0 %v510
        %544 = vmatprep.subr.bf16.mxu0 %v513
        %545 = vmatpush1.bf16.msra.mxu0 %v512
        %546 = vmatprep.subr.bf16.mxu0 %v515
        %547 = vmatpush1.bf16.msra.mxu0 %v514
        %548 = vmatprep.subr.bf16.mxu0 %v517
        %549 = vmatpush1.bf16.msra.mxu0 %v516
        %550 = vmatprep.subr.bf16.mxu0 %v519
        %551 = vmatpush1.bf16.msra.mxu0 %v518
        %552 = vmatprep.subr.bf16.mxu0 0
        %553 = vmatpush1.bf16.msra.mxu0 0
        %554 = vmatprep.subr.bf16.mxu0 0
        %555 = vmatpush1.bf16.msra.mxu0 0
        %556 = vmatprep.subr.bf16.mxu0 0
        %557 = vmatpush1.bf16.msra.mxu0 0
        %558 = vmatprep.subr.bf16.mxu0 0
        %559 = vmatpush1.bf16.msra.mxu0 0
        %560 = vmatprep.subr.bf16.mxu0 0
        %561 = vmatpush1.bf16.msra.mxu0 0
        %562 = vmatprep.subr.bf16.mxu0 0
        %563 = vmatpush1.bf16.msra.mxu0 0
        %564 = vmatprep.subr.bf16.mxu0 0
        %565 = vmatpush1.bf16.msra.mxu0 0
        %566 = vmatprep.subr.bf16.mxu0 0
        %567 = vmatpush1.bf16.msra.mxu0 0
        %568 = vmatprep.mubr.bf16.mxu0 0
        %569 = vmatmul.mubr.bf16.gmra.mrb[0].mxu0 %v452
        %v570 = vpop.f32.mrb[0].mxu0
        %v571 = vadd.f32 %v437, %v570
        %v572 = vpop.f32.mrb[0].mxu0
        %v573 = vadd.f32 %v441, %v572
        %v574 = vpop.f32.mrb[0].mxu0
        %v575 = vadd.f32 %v437, %v574
        %v576 = vpop.f32.mrb[0].mxu0
        %v577 = vadd.f32 %v441, %v576
        %578 = vmatprep.mubr.bf16.mxu0 0
        %579 = vmatmul.mubr.bf16.gmra.mrb[0].mxu0 %v453
        %v580 = vpop.f32.mrb[0].mxu0
        %v581 = vadd.f32 %v437, %v580
        %v582 = vpop.f32.mrb[0].mxu0
        %v583 = vadd.f32 %v441, %v582
        %v584 = vpop.f32.mrb[0].mxu0
        %v585 = vadd.f32 %v437, %v584
        %v586 = vpop.f32.mrb[0].mxu0
        %v587 = vadd.f32 %v441, %v586
        %588 = vdwg.mxu0
        %v589 = vmax.f32 %v571, 0.0
        %v590 = vmax.f32 %v573, 0.0
        %v591 = vmax.f32 %v575, 0.0
        %v592 = vmax.f32 %v577, 0.0
        %v593 = vmax.f32 %v581, 0.0
        %v594 = vmax.f32 %v583, 0.0
        %v595 = vmax.f32 %v585, 0.0
        %v596 = vmax.f32 %v587, 0.0
        %v597 = vpack.c.bf16 %v591, %v589
        %v598 = vpack.c.bf16 %v592, %v590
        %v599 = vpack.c.bf16 %v595, %v593
        %v600 = vpack.c.bf16 %v596, %v594
        %v601 = vld [vmem:[#allocation7] sm:$0xf]
        %v602 = vld [vmem:[#allocation7 + $0x4] sm:$0xf]
        %v603 = vld [vmem:[#allocation7 + $0x8] sm:$0xf]
        %v604 = vld [vmem:[#allocation7 + $0xc] sm:$0xf]
        %v605 = vld [vmem:[#allocation7 + $0x10] sm:$0xf]
        %v606 = vld [vmem:[#allocation7 + $0x14] sm:$0xf]
        %v607 = vld [vmem:[#allocation7 + $0x18] sm:$0xf]
        %v608 = vld [vmem:[#allocation7 + $0x1c] sm:$0xf]
        %v609 = vld [vmem:[#allocation7 + $0x20] sm:$0xf]
        %v610 = vld [vmem:[#allocation7 + $0x24] sm:$0xf]
        %v611 = vld [vmem:[#allocation7 + $0x28] sm:$0xf]
        %v612 = vld [vmem:[#allocation7 + $0x2c] sm:$0xf]
        %v613 = vld [vmem:[#allocation7 + $0x30] sm:$0xf]
        %v614 = vld [vmem:[#allocation7 + $0x34] sm:$0xf]
        %v615 = vld [vmem:[#allocation7 + $0x38] sm:$0xf]
        %v616 = vld [vmem:[#allocation7 + $0x3c] sm:$0xf]
        %v617 = vld [vmem:[#allocation7 + $0x40] sm:$0xf]
        %v618 = vld [vmem:[#allocation7 + $0x44] sm:$0xf]
        %v619 = vld [vmem:[#allocation7 + $0x48] sm:$0xf]
        %v620 = vld [vmem:[#allocation7 + $0x4c] sm:$0xf]
        %v621 = vld [vmem:[#allocation7 + $0x50] sm:$0xf]
        %v622 = vld [vmem:[#allocation7 + $0x54] sm:$0xf]
        %v623 = vld [vmem:[#allocation7 + $0x58] sm:$0xf]
        %v624 = vld [vmem:[#allocation7 + $0x5c] sm:$0xf]
        %v625 = vld [vmem:[#allocation7 + $0x60] sm:$0xf]
        %v626 = vld [vmem:[#allocation7 + $0x64] sm:$0xf]
        %v627 = vld [vmem:[#allocation7 + $0x68] sm:$0xf]
        %v628 = vld [vmem:[#allocation7 + $0x6c] sm:$0xf]
        %v629 = vld [vmem:[#allocation7 + $0x70] sm:$0xf]
        %v630 = vld [vmem:[#allocation7 + $0x74] sm:$0xf]
        %v631 = vld [vmem:[#allocation7 + $0x78] sm:$0xf]
        %v632 = vld [vmem:[#allocation7 + $0x7c] sm:$0xf]
        %v633 = vld [vmem:[%s4] sm:$0x1]
        %v635 = vlaneseq
        %v636 = vshrl.u32 %v635, 7
        %v637 = vsub.s32 0, %v636
        %v638 = vrot.slane %v633, %v637
        %v672 = vunpack.c.l.b16 %v601
        %v673 = vunpack.c.l.b16 %v602
        %v674 = vunpack.c.l.b16 %v603
        %v675 = vunpack.c.l.b16 %v604
        %v676 = vunpack.c.l.b16 %v605
        %v677 = vunpack.c.l.b16 %v606
        %v678 = vunpack.c.l.b16 %v607
        %v679 = vunpack.c.l.b16 %v608
        %v680 = vunpack.c.l.b16 %v609
        %v681 = vunpack.c.l.b16 %v610
        %v682 = vunpack.c.l.b16 %v611
        %v683 = vunpack.c.l.b16 %v612
        %v684 = vunpack.c.l.b16 %v613
        %v685 = vunpack.c.l.b16 %v614
        %v686 = vunpack.c.l.b16 %v615
        %v687 = vunpack.c.l.b16 %v616
        %v688 = vunpack.c.l.b16 %v617
        %v689 = vunpack.c.l.b16 %v618
        %v690 = vunpack.c.l.b16 %v619
        %v691 = vunpack.c.l.b16 %v620
        %v692 = vunpack.c.l.b16 %v621
        %v693 = vunpack.c.l.b16 %v622
        %v694 = vunpack.c.l.b16 %v623
        %v695 = vunpack.c.l.b16 %v624
        %v696 = vunpack.c.l.b16 %v625
        %v697 = vunpack.c.l.b16 %v626
        %v698 = vunpack.c.l.b16 %v627
        %v699 = vunpack.c.l.b16 %v628
        %v700 = vunpack.c.l.b16 %v629
        %v701 = vunpack.c.l.b16 %v630
        %v702 = vunpack.c.l.b16 %v631
        %v703 = vunpack.c.l.b16 %v632
        %v704 = vpack.c.b16 %v673, %v672
        %v705 = vpack.c.b16 %v675, %v674
        %v706 = vpack.c.b16 %v677, %v676
        %v707 = vpack.c.b16 %v679, %v678
        %v708 = vpack.c.b16 %v681, %v680
        %v709 = vpack.c.b16 %v683, %v682
        %v710 = vpack.c.b16 %v685, %v684
        %v711 = vpack.c.b16 %v687, %v686
        %v712 = vpack.c.b16 %v689, %v688
        %v713 = vpack.c.b16 %v691, %v690
        %v714 = vpack.c.b16 %v693, %v692
        %v715 = vpack.c.b16 %v695, %v694
        %v716 = vpack.c.b16 %v697, %v696
        %v717 = vpack.c.b16 %v699, %v698
        %v718 = vpack.c.b16 %v701, %v700
        %v719 = vpack.c.b16 %v703, %v702
        %736 = vmatprep.subr.bf16.mxu0 0
        %737 = vmatpush1.bf16.msra.mxu0 %v704
        %738 = vmatprep.subr.bf16.mxu0 0
        %739 = vmatpush1.bf16.msra.mxu0 %v705
        %740 = vmatprep.subr.bf16.mxu0 0
        %741 = vmatpush1.bf16.msra.mxu0 %v706
        %742 = vmatprep.subr.bf16.mxu0 0
        %743 = vmatpush1.bf16.msra.mxu0 %v707
        %744 = vmatprep.subr.bf16.mxu0 0
        %745 = vmatpush1.bf16.msra.mxu0 %v708
        %746 = vmatprep.subr.bf16.mxu0 0
        %747 = vmatpush1.bf16.msra.mxu0 %v709
        %748 = vmatprep.subr.bf16.mxu0 0
        %749 = vmatpush1.bf16.msra.mxu0 %v710
        %750 = vmatprep.subr.bf16.mxu0 0
        %751 = vmatpush1.bf16.msra.mxu0 %v711
        %752 = vmatprep.subr.bf16.mxu0 0
        %753 = vmatpush1.bf16.msra.mxu0 %v712
        %754 = vmatprep.subr.bf16.mxu0 0
        %755 = vmatpush1.bf16.msra.mxu0 %v713
        %756 = vmatprep.subr.bf16.mxu0 0
        %757 = vmatpush1.bf16.msra.mxu0 %v714
        %758 = vmatprep.subr.bf16.mxu0 0
        %759 = vmatpush1.bf16.msra.mxu0 %v715
        %760 = vmatprep.subr.bf16.mxu0 0
        %761 = vmatpush1.bf16.msra.mxu0 %v716
        %762 = vmatprep.subr.bf16.mxu0 0
        %763 = vmatpush1.bf16.msra.mxu0 %v717
        %764 = vmatprep.subr.bf16.mxu0 0
        %765 = vmatpush1.bf16.msra.mxu0 %v718
        %766 = vmatprep.subr.bf16.mxu0 0
        %767 = vmatpush1.bf16.msra.mxu0 %v719
        %768 = vmatprep.mubr.bf16.mxu0 %v598
        %769 = vmatmul.mubr.bf16.gmra.mrb[0].mxu0 %v597
        %v770 = vpop.f32.mrb[0].mxu0
        %v771 = vadd.f32 %v638, %v770
        %v772 = vpop.f32.mrb[0].mxu0
        %v773 = vpop.f32.mrb[0].mxu0
        %v774 = vadd.f32 %v638, %v773
        %v775 = vpop.f32.mrb[0].mxu0
        %776 = vmatprep.mubr.bf16.mxu0 %v600
        %777 = vmatmul.mubr.bf16.gmra.mrb[0].mxu0 %v599
        %v778 = vpop.f32.mrb[0].mxu0
        %v779 = vadd.f32 %v638, %v778
        %v780 = vpop.f32.mrb[0].mxu0
        %v781 = vpop.f32.mrb[0].mxu0
        %v782 = vadd.f32 %v638, %v781
        %v783 = vpop.f32.mrb[0].mxu0
        %784 = vdwg.mxu0
        %v785 = vpack.c.bf16 %v774, %v771
        %v786 = vpack.c.bf16 %v782, %v779
        %v787 = vld [vmem:[#allocation8] sm:$0xff]
        %v788 = vld [vmem:[#allocation8 + $0x8] sm:$0xff]
        %v789 = vld [vmem:[#allocation8 + $0x10] sm:$0xff]
        %v790 = vld [vmem:[#allocation8 + $0x18] sm:$0xff]
        %v791 = vld [vmem:[#allocation8 + $0x20] sm:$0xff]
        %v792 = vld [vmem:[#allocation8 + $0x28] sm:$0xff]
        %v793 = vld [vmem:[#allocation8 + $0x30] sm:$0xff]
        %v794 = vld [vmem:[#allocation8 + $0x38] sm:$0xff]
        %v795 = vld [vmem:[#allocation8 + $0x40] sm:$0xff]
        %v796 = vld [vmem:[#allocation8 + $0x48] sm:$0xff]
        %v797 = vld [vmem:[#allocation8 + $0x50] sm:$0xff]
        %v798 = vld [vmem:[#allocation8 + $0x58] sm:$0xff]
        %v799 = vld [vmem:[#allocation8 + $0x60] sm:$0xff]
        %v800 = vld [vmem:[#allocation8 + $0x68] sm:$0xff]
        %v801 = vld [vmem:[#allocation8 + $0x70] sm:$0xff]
        %v802 = vld [vmem:[#allocation8 + $0x78] sm:$0xff]
        %v803 = vld [vmem:[%s6] sm:$0x3]
        %v805 = vlaneseq
        %v806 = vshrl.u32 %v805, 7
        %v807 = vsub.s32 0, %v806
        %v808 = vrot.slane %v803, %v807
        %v809 = vlaneseq
        %v810 = vshrl.u32 %v809, 7
        %v811 = vsub.s32 1, %v810
        %v812 = vrot.slane %v803, %v811
        %v831 = vunpack.c.l.b16 %v787
        %v832 = vunpack.c.h.b16 %v787
        %v833 = vunpack.c.l.b16 %v788
        %v834 = vunpack.c.h.b16 %v788
        %v835 = vunpack.c.l.b16 %v789
        %v836 = vunpack.c.h.b16 %v789
        %v837 = vunpack.c.l.b16 %v790
        %v838 = vunpack.c.h.b16 %v790
        %v839 = vunpack.c.l.b16 %v791
        %v840 = vunpack.c.h.b16 %v791
        %v841 = vunpack.c.l.b16 %v792
        %v842 = vunpack.c.h.b16 %v792
        %v843 = vunpack.c.l.b16 %v793
        %v844 = vunpack.c.h.b16 %v793
        %v845 = vunpack.c.l.b16 %v794
        %v846 = vunpack.c.h.b16 %v794
        %v847 = vunpack.c.l.b16 %v795
        %v848 = vunpack.c.h.b16 %v795
        %v849 = vunpack.c.l.b16 %v796
        %v850 = vunpack.c.h.b16 %v796
        %v851 = vunpack.c.l.b16 %v797
        %v852 = vunpack.c.h.b16 %v797
        %v853 = vunpack.c.l.b16 %v798
        %v854 = vunpack.c.h.b16 %v798
        %v855 = vunpack.c.l.b16 %v799
        %v856 = vunpack.c.h.b16 %v799
        %v857 = vunpack.c.l.b16 %v800
        %v858 = vunpack.c.h.b16 %v800
        %v859 = vunpack.c.l.b16 %v801
        %v860 = vunpack.c.h.b16 %v801
        %v861 = vunpack.c.l.b16 %v802
        %v862 = vunpack.c.h.b16 %v802
        %v863 = vpack.c.b16 %v833, %v831
        %v864 = vpack.c.b16 %v834, %v832
        %v865 = vpack.c.b16 %v837, %v835
        %v866 = vpack.c.b16 %v838, %v836
        %v867 = vpack.c.b16 %v841, %v839
        %v868 = vpack.c.b16 %v842, %v840
        %v869 = vpack.c.b16 %v845, %v843
        %v870 = vpack.c.b16 %v846, %v844
        %v871 = vpack.c.b16 %v849, %v847
        %v872 = vpack.c.b16 %v850, %v848
        %v873 = vpack.c.b16 %v853, %v851
        %v874 = vpack.c.b16 %v854, %v852
        %v875 = vpack.c.b16 %v857, %v855
        %v876 = vpack.c.b16 %v858, %v856
        %v877 = vpack.c.b16 %v861, %v859
        %v878 = vpack.c.b16 %v862, %v860
        %895 = vmatprep.subr.bf16.mxu0 %v864
        %896 = vmatpush1.bf16.msra.mxu0 %v863
        %897 = vmatprep.subr.bf16.mxu0 %v866
        %898 = vmatpush1.bf16.msra.mxu0 %v865
        %899 = vmatprep.subr.bf16.mxu0 %v868
        %900 = vmatpush1.bf16.msra.mxu0 %v867
        %901 = vmatprep.subr.bf16.mxu0 %v870
        %902 = vmatpush1.bf16.msra.mxu0 %v869
        %903 = vmatprep.subr.bf16.mxu0 %v872
        %904 = vmatpush1.bf16.msra.mxu0 %v871
        %905 = vmatprep.subr.bf16.mxu0 %v874
        %906 = vmatpush1.bf16.msra.mxu0 %v873
        %907 = vmatprep.subr.bf16.mxu0 %v876
        %908 = vmatpush1.bf16.msra.mxu0 %v875
        %909 = vmatprep.subr.bf16.mxu0 %v878
        %910 = vmatpush1.bf16.msra.mxu0 %v877
        %911 = vmatprep.subr.bf16.mxu0 0
        %912 = vmatpush1.bf16.msra.mxu0 0
        %913 = vmatprep.subr.bf16.mxu0 0
        %914 = vmatpush1.bf16.msra.mxu0 0
        %915 = vmatprep.subr.bf16.mxu0 0
        %916 = vmatpush1.bf16.msra.mxu0 0
        %917 = vmatprep.subr.bf16.mxu0 0
        %918 = vmatpush1.bf16.msra.mxu0 0
        %919 = vmatprep.subr.bf16.mxu0 0
        %920 = vmatpush1.bf16.msra.mxu0 0
        %921 = vmatprep.subr.bf16.mxu0 0
        %922 = vmatpush1.bf16.msra.mxu0 0
        %923 = vmatprep.subr.bf16.mxu0 0
        %924 = vmatpush1.bf16.msra.mxu0 0
        %925 = vmatprep.subr.bf16.mxu0 0
        %926 = vmatpush1.bf16.msra.mxu0 0
        %927 = vmatprep.mubr.bf16.mxu0 0
        %928 = vmatmul.mubr.bf16.gmra.mrb[0].mxu0 %v785
        %v929 = vpop.f32.mrb[0].mxu0
        %v930 = vadd.f32 %v808, %v929
        %v931 = vpop.f32.mrb[0].mxu0
        %v932 = vadd.f32 %v812, %v931
        %v933 = vpop.f32.mrb[0].mxu0
        %v934 = vadd.f32 %v808, %v933
        %v935 = vpop.f32.mrb[0].mxu0
        %v936 = vadd.f32 %v812, %v935
        %937 = vmatprep.mubr.bf16.mxu0 0
        %938 = vmatmul.mubr.bf16.gmra.mrb[0].mxu0 %v786
        %v939 = vpop.f32.mrb[0].mxu0
        %v940 = vadd.f32 %v808, %v939
        %v941 = vpop.f32.mrb[0].mxu0
        %v942 = vadd.f32 %v812, %v941
        %v943 = vpop.f32.mrb[0].mxu0
        %v944 = vadd.f32 %v808, %v943
        %v945 = vpop.f32.mrb[0].mxu0
        %v946 = vadd.f32 %v812, %v945
        %947 = vdwg.mxu0
        %v948 = vmax.f32 %v930, 0.0
        %v949 = vmax.f32 %v932, 0.0
        %v950 = vmax.f32 %v934, 0.0
        %v951 = vmax.f32 %v936, 0.0
        %v952 = vmax.f32 %v940, 0.0
        %v953 = vmax.f32 %v942, 0.0
        %v954 = vmax.f32 %v944, 0.0
        %v955 = vmax.f32 %v946, 0.0
        %v956 = vpack.c.bf16 %v950, %v948
        %v957 = vpack.c.bf16 %v951, %v949
        %v958 = vpack.c.bf16 %v954, %v952
        %v959 = vpack.c.bf16 %v955, %v953
        %v960 = vld [vmem:[#allocation10] sm:$0xf]
        %v961 = vld [vmem:[#allocation10 + $0x4] sm:$0xf]
        %v962 = vld [vmem:[#allocation10 + $0x8] sm:$0xf]
        %v963 = vld [vmem:[#allocation10 + $0xc] sm:$0xf]
        %v964 = vld [vmem:[#allocation10 + $0x10] sm:$0xf]
        %v965 = vld [vmem:[#allocation10 + $0x14] sm:$0xf]
        %v966 = vld [vmem:[#allocation10 + $0x18] sm:$0xf]
        %v967 = vld [vmem:[#allocation10 + $0x1c] sm:$0xf]
        %v968 = vld [vmem:[#allocation10 + $0x20] sm:$0xf]
        %v969 = vld [vmem:[#allocation10 + $0x24] sm:$0xf]
        %v970 = vld [vmem:[#allocation10 + $0x28] sm:$0xf]
        %v971 = vld [vmem:[#allocation10 + $0x2c] sm:$0xf]
        %v972 = vld [vmem:[#allocation10 + $0x30] sm:$0xf]
        %v973 = vld [vmem:[#allocation10 + $0x34] sm:$0xf]
        %v974 = vld [vmem:[#allocation10 + $0x38] sm:$0xf]
        %v975 = vld [vmem:[#allocation10 + $0x3c] sm:$0xf]
        %v976 = vld [vmem:[#allocation10 + $0x40] sm:$0xf]
        %v977 = vld [vmem:[#allocation10 + $0x44] sm:$0xf]
        %v978 = vld [vmem:[#allocation10 + $0x48] sm:$0xf]
        %v979 = vld [vmem:[#allocation10 + $0x4c] sm:$0xf]
        %v980 = vld [vmem:[#allocation10 + $0x50] sm:$0xf]
        %v981 = vld [vmem:[#allocation10 + $0x54] sm:$0xf]
        %v982 = vld [vmem:[#allocation10 + $0x58] sm:$0xf]
        %v983 = vld [vmem:[#allocation10 + $0x5c] sm:$0xf]
        %v984 = vld [vmem:[#allocation10 + $0x60] sm:$0xf]
        %v985 = vld [vmem:[#allocation10 + $0x64] sm:$0xf]
        %v986 = vld [vmem:[#allocation10 + $0x68] sm:$0xf]
        %v987 = vld [vmem:[#allocation10 + $0x6c] sm:$0xf]
        %v988 = vld [vmem:[#allocation10 + $0x70] sm:$0xf]
        %v989 = vld [vmem:[#allocation10 + $0x74] sm:$0xf]
        %v990 = vld [vmem:[#allocation10 + $0x78] sm:$0xf]
        %v991 = vld [vmem:[#allocation10 + $0x7c] sm:$0xf]
        %v992 = vld [vmem:[%s8] sm:$0x1]
        %v994 = vlaneseq
        %v995 = vshrl.u32 %v994, 7
        %v996 = vsub.s32 0, %v995
        %v997 = vrot.slane %v992, %v996
        %v1031 = vunpack.c.l.b16 %v960
        %v1032 = vunpack.c.l.b16 %v961
        %v1033 = vunpack.c.l.b16 %v962
        %v1034 = vunpack.c.l.b16 %v963
        %v1035 = vunpack.c.l.b16 %v964
        %v1036 = vunpack.c.l.b16 %v965
        %v1037 = vunpack.c.l.b16 %v966
        %v1038 = vunpack.c.l.b16 %v967
        %v1039 = vunpack.c.l.b16 %v968
        %v1040 = vunpack.c.l.b16 %v969
        %v1041 = vunpack.c.l.b16 %v970
        %v1042 = vunpack.c.l.b16 %v971
        %v1043 = vunpack.c.l.b16 %v972
        %v1044 = vunpack.c.l.b16 %v973
        %v1045 = vunpack.c.l.b16 %v974
        %v1046 = vunpack.c.l.b16 %v975
        %v1047 = vunpack.c.l.b16 %v976
        %v1048 = vunpack.c.l.b16 %v977
        %v1049 = vunpack.c.l.b16 %v978
        %v1050 = vunpack.c.l.b16 %v979
        %v1051 = vunpack.c.l.b16 %v980
        %v1052 = vunpack.c.l.b16 %v981
        %v1053 = vunpack.c.l.b16 %v982
        %v1054 = vunpack.c.l.b16 %v983
        %v1055 = vunpack.c.l.b16 %v984
        %v1056 = vunpack.c.l.b16 %v985
        %v1057 = vunpack.c.l.b16 %v986
        %v1058 = vunpack.c.l.b16 %v987
        %v1059 = vunpack.c.l.b16 %v988
        %v1060 = vunpack.c.l.b16 %v989
        %v1061 = vunpack.c.l.b16 %v990
        %v1062 = vunpack.c.l.b16 %v991
        %v1063 = vpack.c.b16 %v1032, %v1031
        %v1064 = vpack.c.b16 %v1034, %v1033
        %v1065 = vpack.c.b16 %v1036, %v1035
        %v1066 = vpack.c.b16 %v1038, %v1037
        %v1067 = vpack.c.b16 %v1040, %v1039
        %v1068 = vpack.c.b16 %v1042, %v1041
        %v1069 = vpack.c.b16 %v1044, %v1043
        %v1070 = vpack.c.b16 %v1046, %v1045
        %v1071 = vpack.c.b16 %v1048, %v1047
        %v1072 = vpack.c.b16 %v1050, %v1049
        %v1073 = vpack.c.b16 %v1052, %v1051
        %v1074 = vpack.c.b16 %v1054, %v1053
        %v1075 = vpack.c.b16 %v1056, %v1055
        %v1076 = vpack.c.b16 %v1058, %v1057
        %v1077 = vpack.c.b16 %v1060, %v1059
        %v1078 = vpack.c.b16 %v1062, %v1061
        %1095 = vmatprep.subr.bf16.mxu0 0
        %1096 = vmatpush1.bf16.msra.mxu0 %v1063
        %1097 = vmatprep.subr.bf16.mxu0 0
        %1098 = vmatpush1.bf16.msra.mxu0 %v1064
        %1099 = vmatprep.subr.bf16.mxu0 0
        %1100 = vmatpush1.bf16.msra.mxu0 %v1065
        %1101 = vmatprep.subr.bf16.mxu0 0
        %1102 = vmatpush1.bf16.msra.mxu0 %v1066
        %1103 = vmatprep.subr.bf16.mxu0 0
        %1104 = vmatpush1.bf16.msra.mxu0 %v1067
        %1105 = vmatprep.subr.bf16.mxu0 0
        %1106 = vmatpush1.bf16.msra.mxu0 %v1068
        %1107 = vmatprep.subr.bf16.mxu0 0
        %1108 = vmatpush1.bf16.msra.mxu0 %v1069
        %1109 = vmatprep.subr.bf16.mxu0 0
        %1110 = vmatpush1.bf16.msra.mxu0 %v1070
        %1111 = vmatprep.subr.bf16.mxu0 0
        %1112 = vmatpush1.bf16.msra.mxu0 %v1071
        %1113 = vmatprep.subr.bf16.mxu0 0
        %1114 = vmatpush1.bf16.msra.mxu0 %v1072
        %1115 = vmatprep.subr.bf16.mxu0 0
        %1116 = vmatpush1.bf16.msra.mxu0 %v1073
        %1117 = vmatprep.subr.bf16.mxu0 0
        %1118 = vmatpush1.bf16.msra.mxu0 %v1074
        %1119 = vmatprep.subr.bf16.mxu0 0
        %1120 = vmatpush1.bf16.msra.mxu0 %v1075
        %1121 = vmatprep.subr.bf16.mxu0 0
        %1122 = vmatpush1.bf16.msra.mxu0 %v1076
        %1123 = vmatprep.subr.bf16.mxu0 0
        %1124 = vmatpush1.bf16.msra.mxu0 %v1077
        %1125 = vmatprep.subr.bf16.mxu0 0
        %1126 = vmatpush1.bf16.msra.mxu0 %v1078
        %1127 = vmatprep.mubr.bf16.mxu0 %v957
        %1128 = vmatmul.mubr.bf16.gmra.mrb[0].mxu0 %v956
        %v1129 = vpop.f32.mrb[0].mxu0
        %v1130 = vadd.f32 %v997, %v1129
        %v1131 = vpop.f32.mrb[0].mxu0
        %v1132 = vpop.f32.mrb[0].mxu0
        %v1133 = vadd.f32 %v997, %v1132
        %v1134 = vpop.f32.mrb[0].mxu0
        %1135 = vmatprep.mubr.bf16.mxu0 %v959
        %1136 = vmatmul.mubr.bf16.gmra.mrb[0].mxu0 %v958
        %v1137 = vpop.f32.mrb[0].mxu0
        %v1138 = vadd.f32 %v997, %v1137
        %v1139 = vpop.f32.mrb[0].mxu0
        %v1140 = vpop.f32.mrb[0].mxu0
        %v1141 = vadd.f32 %v997, %v1140
        %v1142 = vpop.f32.mrb[0].mxu0
        %1143 = vdwg.mxu0
        %1144 = vst [vmem:[%s408] sm:$0xff] %v1130
        %1145 = vst [vmem:[%s408 + $0x8] sm:$0xff] %v1133
        %1146 = vst [vmem:[%s408 + $0x10] sm:$0xff] %v1138
        %1147 = vst [vmem:[%s408 + $0x18] sm:$0xff] %v1141
        %s1148 = sand.u32 %s230, 1
        %s1149 = scalar_lea.sflag [#allocation4], %s1148
        %s1150 = sand.u32 %s230, 1
        %s1151 = smul.addr %s1150, 32
        %s1152 = scalar_lea.vmem [#allocation11], %s1151
        // Predicated region
        $region77: #{tpu_custom_call.1} parent=55 // pred_check
          %p1153 = pneg %p240
        $region78: #{tpu_custom_call.1} parent=55 // pred_check_branch
          %1155 = sbr.rel (%p1153) target = $region80
        $region79: #{tpu_custom_call.1} parent=55 // pred_region
          %s1156 = smul.u32 4, %s28
          %s1158 = ssub.s32 512, 512
          %1159 = vsyncadd %s1149, %s1158
          %s1160 = smul.addr %s1156, 128
          %s1161 = scalar_lea.hbm %s9, %s1160
          %s1162 = sshll.u32 %s1152, 4
          %s1163 = int_to_ptr.vmem [resolvable:$true] %s1162
          %1168 = dma.vmem_to_hbm [thread:$0]  %s1163, 512, %s1161, %s1149, 128, 128, 8
        $region80: #{tpu_custom_call.1} parent=55 // pred_fallthru
          _
      $region56: #{tpu_custom_call.1} parent=5 // pred_fallthru
        _
      %p1169 = scmp.le.s32.totalorder 2, %s23
      // Predicated region
      $region81: #{tpu_custom_call.1} parent=5 // pred_check
        %p1170 = pneg %p1169
      $region82: #{tpu_custom_call.1} parent=5 // pred_check_branch
        %1172 = sbr.rel (%p1170) target = $region84
      $region83: #{tpu_custom_call.1} parent=5 // pred_region
        %s1173 = ssub.s32 %s23, 2
        // Predicated region
        $region85: #{tpu_custom_call.1} parent=83 // pred_check
          %p1174 = pneg %p246
        $region86: #{tpu_custom_call.1} parent=83 // pred_check_branch
          %1176 = sbr.rel (%p1174) target = $region88
        $region87: #{tpu_custom_call.1} parent=83 // pred_region
          %s1177 = sand.u32 %s231, 1
          %s1178 = scalar_lea.sflag [#allocation4], %s1177
          %s1179 = sand.u32 %s231, 1
          %s1180 = smul.addr %s1179, 32
          %s1181 = scalar_lea.vmem [#allocation11], %s1180
          %1182 = dma.done %s1178, 512
        $region88: #{tpu_custom_call.1} parent=83 // pred_fallthru
          _
      $region84: #{tpu_custom_call.1} parent=5 // pred_fallthru
        _
    $region6: #{tpu_custom_call.1} parent=1 // loop_footer
      %s27 = sadd.s32 1, %s23
    $region7: #{tpu_custom_call.1} parent=1 // loop_footer_branch
      %22 = sbr.rel target = $region3
    $region8: #{tpu_custom_call.1} parent=1 // loop_exit
      _
    %1183 = vsyncpa [#allocation3], 1
    %s1184 = scalar_lea.sflag [#allocation3], 1
    %1185 = vsyncpa %s1184, 1
    %1186 = vsyncpa [#allocation6], 1
    %1187 = vsyncpa [#allocation9], 1
    %1188 = vsyncpa [#allocation4], 1
    %s1189 = scalar_lea.sflag [#allocation4], 1
    %1190 = vsyncpa %s1189, 1

</llo_original>
